<compile_context>
chip_gen: v7x
topology: tpu7x:2x2x1
jax: 0.10.0
libtpu: 0.0.40
codegen_flags: <defaults>
</compile_context>

<pallas_src>
import math
from functools import partial

import jax
import jax.numpy as jnp
from jax.experimental import pallas as pl
from jax.experimental.pallas import tpu as pltpu


def _round_up(x: int, m: int) -> int:
    return ((x + m - 1) // m) * m


# --------------------------------------------------------------------------
# Kernel body
# --------------------------------------------------------------------------
def _mlp_kernel(*refs, num_layers: int, sigmoid_output: bool, compute_dtype):
    """refs = (x_ref, w0, b0, w1, b1, ..., w_{L-1}, b_{L-1}, o_ref)."""
    x_ref = refs[0]
    o_ref = refs[-1]
    wb_refs = refs[1:-1]

    # Cast the MXU feed to the compute dtype (bf16 by default) inside the
    # kernel -> no extra HBM pass over x, half-width MXU operands.
    h = x_ref[...].astype(compute_dtype)                     # (bm, in_dim)
    for i in range(num_layers):
        w = wb_refs[2 * i][...]                              # (fan_in, fan_out), compute_dtype
        b = wb_refs[2 * i + 1][...]                          # (1, fan_out), f32
        # MXU matmul with f32 accumulation; bias-add / ReLU stay in f32
        # (v5e has no bf16 VALU).
        acc = jnp.dot(h, w, preferred_element_type=jnp.float32) + b
        if i < num_layers - 1:
            acc = jnp.maximum(acc, 0.0)                      # ReLU (VPU, f32)
            h = acc.astype(compute_dtype)                    # narrow feed for next dot
        else:
            h = acc
    if sigmoid_output:
        h = jax.nn.sigmoid(h)                                # EUP transcendental
    o_ref[...] = h.astype(o_ref.dtype)


# --------------------------------------------------------------------------
# Wrapper
# --------------------------------------------------------------------------
_ACT_VMEM_BUDGET = 24 << 20  # rough budget for row-tile-proportional buffers


def _choose_block_rows(M, in_dim, widths, out_p, c_bytes, block_rows_cap):
    if M <= 8:
        return M
    # >= 2 grid steps so the "parallel" row axis can shard across both
    # TensorCores on v7x; free on single-TC v5e/v6e.
    bm = min(block_rows_cap, _round_up(pl.cdiv(M, 2), 8))
    # Keep bm-proportional VMEM (x, out, live f32 intermediates) bounded.
    max_w = max(widths)
    per_row = (2 * in_dim * max(c_bytes, 4)   # x block, double-buffered
               + 2 * out_p * 4                # out block, double-buffered
               + 2 * max_w * 4)               # live f32 intermediate (+ bf16 copy)
    bm_cap = max(8, (_ACT_VMEM_BUDGET // max(per_row, 1)) // 8 * 8)
    return max(8, min(bm, bm_cap))


def mlp_forward(x, weights, biases, *, sigmoid_output: bool = False,
                compute_dtype=jnp.bfloat16, block_rows: int = 1024,
                pad_output_lanes: bool = True, single_buffer_weights: bool = True):
    """x: (..., input_dim).  weights[i]: (fan_in_i, fan_out_i) (= torch W.T),
    biases[i]: (fan_out_i,)."""
    *lead, in_dim = x.shape
    num_layers = len(weights)
    out_dim = weights[-1].shape[1]

    M = math.prod(lead) if lead else 1
    x2 = x.reshape(M, in_dim)

    c_bytes = jnp.dtype(compute_dtype).itemsize

    # Cast weights once outside the kernel; biases stay f32 (tiny, and the
    # bias-add runs in the f32 accumulator).
    ws = [w.astype(compute_dtype) for w in weights]
    bs = [b.astype(jnp.float32).reshape(1, -1) for b in biases]

    # Lane-dense output: zero-pad the final fan_out to a multiple of 128 so the
    # output store is unmasked; extra columns are sliced off outside.
    out_p = _round_up(out_dim, 128) if pad_output_lanes else out_dim
    if out_p != out_dim:
        ws[-1] = jnp.pad(ws[-1], ((0, 0), (0, out_p - out_dim)))
        bs[-1] = jnp.pad(bs[-1], ((0, 0), (0, out_p - out_dim)))

    widths = [in_dim] + [w.shape[1] for w in ws]
    bm = _choose_block_rows(M, in_dim, widths, out_p, c_bytes, block_rows)
    grid = (pl.cdiv(M, bm),)

    # Explicit scoped-VMEM limit: >= the default (32 MiB), <= v7x physical (64 MiB).
    w_resident = sum(w.size * c_bytes + b.size * 4 for w, b in zip(ws, bs))
    est = (2 * bm * in_dim * max(c_bytes, x.dtype.itemsize)
           + 2 * bm * out_p * x.dtype.itemsize
           + 2 * w_resident
           + 2 * bm * max(widths) * 4)
    vmem_limit = int(min(max(2 * est, 32 << 20), 64 << 20))

    args = [x2]
    for w, b in zip(ws, bs):
        args.append(w)
        args.append(b)

    kernel = partial(_mlp_kernel, num_layers=num_layers,
                     sigmoid_output=sigmoid_output, compute_dtype=compute_dtype)

    def _const_spec(shape, single_buffer):
        # Grid-invariant block; single-buffering just saves VMEM.
        if single_buffer:
            return pl.BlockSpec(shape, lambda i: (0, 0),
                                pipeline_mode=pl.Buffered(1))
        return pl.BlockSpec(shape, lambda i: (0, 0))

    def _call(single_buffer):
        in_specs = [pl.BlockSpec((bm, in_dim), lambda i: (i, 0))]
        for w, b in zip(ws, bs):
            in_specs.append(_const_spec(w.shape, single_buffer))
            in_specs.append(_const_spec(b.shape, single_buffer))
        return pl.pallas_call(
            kernel,
            out_shape=jax.ShapeDtypeStruct((M, out_p), x.dtype),
            grid_spec=pl.GridSpec(
                grid=grid,
                in_specs=in_specs,
                out_specs=pl.BlockSpec((bm, out_p), lambda i: (i, 0)),
            ),
            compiler_params=pltpu.CompilerParams(
                dimension_semantics=("parallel",),
                vmem_limit_bytes=vmem_limit,
            ),
        )(*args)

    try:
        out = _call(single_buffer_weights)
    except Exception:
        # Fallback for JAX versions that reject pipeline_mode=pl.Buffered(1):
        # plain (double-buffered) constant blocks.
        out = _call(False)

    if out_p != out_dim:
        out = out[:, :out_dim]
    return out.reshape(*lead, out_dim)


# --------------------------------------------------------------------------
# Parameters + pure-JAX reference
# --------------------------------------------------------------------------
def make_params(key, input_dim: int, hidden_dim: int, output_dim: int,
                num_layers: int):
    """Deterministic synthetic nn.Linear weights, stored as (in, out)."""
    h = [hidden_dim] * (num_layers - 1)
    dims = list(zip([input_dim] + h, h + [output_dim]))
    keys = jax.random.split(key, 2 * num_layers)
    weights, biases = [], []
    for li, (fi, fo) in enumerate(dims):
        bound = 1.0 / math.sqrt(fi)
        w = jax.random.uniform(keys[2 * li], (fi, fo), jnp.float32, -bound, bound)
        b = jax.random.uniform(keys[2 * li + 1], (fo,), jnp.float32, -bound, bound)
        weights.append(w)
        biases.append(b)
    return weights, biases


def reference_forward(x, weights, biases, *, sigmoid_output: bool = False):
    """Pure-JAX f32 reference mirroring the PyTorch MLP.forward."""
    num_layers = len(weights)
    h = x
    for i, (w, b) in enumerate(zip(weights, biases)):
        h = h @ w + b
        if i < num_layers - 1:
            h = jax.nn.relu(h)
    if sigmoid_output:
        h = jax.nn.sigmoid(h)
    return h


if __name__ == "__main__":
    # Small shapes consistent with the SAM mask-decoder MLP heads.
    input_dim, hidden_dim, output_dim, num_layers = 64, 128, 32, 3
    B, N = 2, 8  # batch, tokens

    key = jax.random.PRNGKey(0)
    kx, kp = jax.random.split(key)
    x = jax.random.normal(kx, (B, N, input_dim), jnp.float32)
    weights, biases = make_params(kp, input_dim, hidden_dim, output_dim, num_layers)

    ref = reference_forward(x, weights, biases, sigmoid_output=False)
    ref_s = reference_forward(x, weights, biases, sigmoid_output=True)

    # f32-compute path: tight-tolerance sanity check of the fused kernel math.
    out_f32 = jax.block_until_ready(
        mlp_forward(x, weights, biases, sigmoid_output=False,
                    compute_dtype=jnp.float32))
    assert out_f32.shape == (B, N, output_dim)
    assert jnp.allclose(out_f32, ref, atol=1e-4, rtol=1e-4), "mismatch (f32 path)"

    # Default bf16-MXU path (f32 accumulation): looser tolerance vs f32 ref.
    out = jax.block_until_ready(
        mlp_forward(x, weights, biases, sigmoid_output=False))
    assert out.shape == (B, N, output_dim)
    assert jnp.allclose(out, ref, atol=3e-2, rtol=3e-2), "mismatch (bf16 path)"

    # sigmoid_output=True path.
    out_s = jax.block_until_ready(
        mlp_forward(x, weights, biases, sigmoid_output=True))
    assert jnp.allclose(out_s, ref_s, atol=3e-2, rtol=3e-2), "mismatch (sigmoid)"

    print("KERNEL_OK")
</pallas_src>

<mosaic_0001>
module attributes {stable_mosaic.version = 11 : i64} {
  func.func @_mlp_kernel(%arg0: i32, %arg1: memref<8x64xf32, #tpu.memory_space<vmem>>, %arg2: memref<64x128xf32, #tpu.memory_space<vmem>>, %arg3: memref<1x128xf32, #tpu.memory_space<vmem>>, %arg4: memref<128x128xf32, #tpu.memory_space<vmem>>, %arg5: memref<1x128xf32, #tpu.memory_space<vmem>>, %arg6: memref<128x128xf32, #tpu.memory_space<vmem>>, %arg7: memref<1x128xf32, #tpu.memory_space<vmem>>, %arg8: memref<8x128xf32, #tpu.memory_space<vmem>>) attributes {dimension_semantics = [#tpu.dimension_semantics<parallel>], iteration_bounds = array<i64: 2>, scalar_prefetch = 0 : i64, scratch_operands = 0 : i64, tpu.core_type = #tpu.core_type<tc>, window_params = [{transform_indices = @transform_0, window_bounds = array<i64: 8, 64>}, {pipeline_mode = #tpu.pipeline_mode<synchronous>, transform_indices = @transform_1, window_bounds = array<i64: 64, 128>}, {pipeline_mode = #tpu.pipeline_mode<synchronous>, transform_indices = @transform_2, window_bounds = array<i64: 1, 128>}, {pipeline_mode = #tpu.pipeline_mode<synchronous>, transform_indices = @transform_3, window_bounds = array<i64: 128, 128>}, {pipeline_mode = #tpu.pipeline_mode<synchronous>, transform_indices = @transform_4, window_bounds = array<i64: 1, 128>}, {pipeline_mode = #tpu.pipeline_mode<synchronous>, transform_indices = @transform_5, window_bounds = array<i64: 128, 128>}, {pipeline_mode = #tpu.pipeline_mode<synchronous>, transform_indices = @transform_6, window_bounds = array<i64: 1, 128>}, {transform_indices = @transform_7, window_bounds = array<i64: 8, 128>}]} {
    %c0 = arith.constant 0 : index
    %c0_0 = arith.constant 0 : index
    %0 = vector.load %arg1[%c0, %c0_0] : memref<8x64xf32, #tpu.memory_space<vmem>>, vector<8x64xf32>
    %c0_1 = arith.constant 0 : index
    %c0_2 = arith.constant 0 : index
    %1 = vector.load %arg2[%c0_1, %c0_2] : memref<64x128xf32, #tpu.memory_space<vmem>>, vector<64x128xf32>
    %c0_3 = arith.constant 0 : index
    %c0_4 = arith.constant 0 : index
    %2 = vector.load %arg3[%c0_3, %c0_4] : memref<1x128xf32, #tpu.memory_space<vmem>>, vector<1x128xf32>
    %cst = arith.constant dense<0.000000e+00> : vector<8x128xf32>
    %3 = tpu.matmul %0, %1, %cst {dimension_numbers = #tpu.dot_dimension_numbers<[1], [0], [0], [1], [0, 0, 1, 1], [], []>} : vector<8x64xf32>, vector<64x128xf32>, vector<8x128xf32> -> vector<8x128xf32>
    %4 = vector.broadcast %2 : vector<1x128xf32> to vector<8x128xf32>
    %5 = arith.addf %3, %4 : vector<8x128xf32>
    %cst_5 = arith.constant 0.000000e+00 : f32
    %6 = vector.broadcast %cst_5 : f32 to vector<8x128xf32>
    %7 = arith.maximumf %5, %6 : vector<8x128xf32>
    %c0_6 = arith.constant 0 : index
    %c0_7 = arith.constant 0 : index
    %8 = vector.load %arg4[%c0_6, %c0_7] : memref<128x128xf32, #tpu.memory_space<vmem>>, vector<128x128xf32>
    %c0_8 = arith.constant 0 : index
    %c0_9 = arith.constant 0 : index
    %9 = vector.load %arg5[%c0_8, %c0_9] : memref<1x128xf32, #tpu.memory_space<vmem>>, vector<1x128xf32>
    %cst_10 = arith.constant dense<0.000000e+00> : vector<8x128xf32>
    %10 = tpu.matmul %7, %8, %cst_10 {dimension_numbers = #tpu.dot_dimension_numbers<[1], [0], [0], [1], [0, 0, 1, 1], [], []>} : vector<8x128xf32>, vector<128x128xf32>, vector<8x128xf32> -> vector<8x128xf32>
    %11 = vector.broadcast %9 : vector<1x128xf32> to vector<8x128xf32>
    %12 = arith.addf %10, %11 : vector<8x128xf32>
    %cst_11 = arith.constant 0.000000e+00 : f32
    %13 = vector.broadcast %cst_11 : f32 to vector<8x128xf32>
    %14 = arith.maximumf %12, %13 : vector<8x128xf32>
    %c0_12 = arith.constant 0 : index
    %c0_13 = arith.constant 0 : index
    %15 = vector.load %arg6[%c0_12, %c0_13] : memref<128x128xf32, #tpu.memory_space<vmem>>, vector<128x128xf32>
    %c0_14 = arith.constant 0 : index
    %c0_15 = arith.constant 0 : index
    %16 = vector.load %arg7[%c0_14, %c0_15] : memref<1x128xf32, #tpu.memory_space<vmem>>, vector<1x128xf32>
    %cst_16 = arith.constant dense<0.000000e+00> : vector<8x128xf32>
    %17 = tpu.matmul %14, %15, %cst_16 {dimension_numbers = #tpu.dot_dimension_numbers<[1], [0], [0], [1], [0, 0, 1, 1], [], []>} : vector<8x128xf32>, vector<128x128xf32>, vector<8x128xf32> -> vector<8x128xf32>
    %18 = vector.broadcast %16 : vector<1x128xf32> to vector<8x128xf32>
    %19 = arith.addf %17, %18 : vector<8x128xf32>
    %c0_17 = arith.constant 0 : index
    %c0_18 = arith.constant 0 : index
    %20 = vector.load %arg8[%c0_17, %c0_18] : memref<8x128xf32, #tpu.memory_space<vmem>>, vector<8x128xf32>
    tpu.vector_store %arg8[%c0_17, %c0_18], %19 {strides = array<i32>} : memref<8x128xf32, #tpu.memory_space<vmem>>, vector<8x128xf32>,
    return
  }
  func.func @transform_0(%arg0: i32) -> (i32, i32) {
    %c0_i32 = arith.constant 0 : i32
    %c0_i32_0 = arith.constant 0 : i32
    return %arg0, %c0_i32 : i32, i32
  }
  func.func @transform_1(%arg0: i32) -> (i32, i32) {
    %c0_i32 = arith.constant 0 : i32
    %c0_i32_0 = arith.constant 0 : i32
    %c0_i32_1 = arith.constant 0 : i32
    return %c0_i32, %c0_i32_0 : i32, i32
  }
  func.func @transform_2(%arg0: i32) -> (i32, i32) {
    %c0_i32 = arith.constant 0 : i32
    %c0_i32_0 = arith.constant 0 : i32
    %c0_i32_1 = arith.constant 0 : i32
    return %c0_i32, %c0_i32_0 : i32, i32
  }
  func.func @transform_3(%arg0: i32) -> (i32, i32) {
    %c0_i32 = arith.constant 0 : i32
    %c0_i32_0 = arith.constant 0 : i32
    %c0_i32_1 = arith.constant 0 : i32
    return %c0_i32, %c0_i32_0 : i32, i32
  }
  func.func @transform_4(%arg0: i32) -> (i32, i32) {
    %c0_i32 = arith.constant 0 : i32
    %c0_i32_0 = arith.constant 0 : i32
    %c0_i32_1 = arith.constant 0 : i32
    return %c0_i32, %c0_i32_0 : i32, i32
  }
  func.func @transform_5(%arg0: i32) -> (i32, i32) {
    %c0_i32 = arith.constant 0 : i32
    %c0_i32_0 = arith.constant 0 : i32
    %c0_i32_1 = arith.constant 0 : i32
    return %c0_i32, %c0_i32_0 : i32, i32
  }
  func.func @transform_6(%arg0: i32) -> (i32, i32) {
    %c0_i32 = arith.constant 0 : i32
    %c0_i32_0 = arith.constant 0 : i32
    %c0_i32_1 = arith.constant 0 : i32
    return %c0_i32, %c0_i32_0 : i32, i32
  }
  func.func @transform_7(%arg0: i32) -> (i32, i32) {
    %c0_i32 = arith.constant 0 : i32
    %c0_i32_0 = arith.constant 0 : i32
    return %arg0, %c0_i32 : i32, i32
  }
}

module attributes {stable_mosaic.version = 11 : i64} {
  func.func @_mlp_kernel(%arg0: i32, %arg1: memref<8x64xf32, #tpu.memory_space<vmem>>, %arg2: memref<64x128xf32, #tpu.memory_space<vmem>>, %arg3: memref<1x128xf32, #tpu.memory_space<vmem>>, %arg4: memref<128x128xf32, #tpu.memory_space<vmem>>, %arg5: memref<1x128xf32, #tpu.memory_space<vmem>>, %arg6: memref<128x128xf32, #tpu.memory_space<vmem>>, %arg7: memref<1x128xf32, #tpu.memory_space<vmem>>, %arg8: memref<8x128xf32, #tpu.memory_space<vmem>>) attributes {dimension_semantics = [#tpu.dimension_semantics<parallel>], iteration_bounds = array<i64: 2>, scalar_prefetch = 0 : i64, scratch_operands = 0 : i64, tpu.core_type = #tpu.core_type<tc>, window_params = [{transform_indices = @transform_0, window_bounds = array<i64: 8, 64>}, {pipeline_mode = #tpu.pipeline_mode<synchronous>, transform_indices = @transform_1, window_bounds = array<i64: 64, 128>}, {pipeline_mode = #tpu.pipeline_mode<synchronous>, transform_indices = @transform_2, window_bounds = array<i64: 1, 128>}, {pipeline_mode = #tpu.pipeline_mode<synchronous>, transform_indices = @transform_3, window_bounds = array<i64: 128, 128>}, {pipeline_mode = #tpu.pipeline_mode<synchronous>, transform_indices = @transform_4, window_bounds = array<i64: 1, 128>}, {pipeline_mode = #tpu.pipeline_mode<synchronous>, transform_indices = @transform_5, window_bounds = array<i64: 128, 128>}, {pipeline_mode = #tpu.pipeline_mode<synchronous>, transform_indices = @transform_6, window_bounds = array<i64: 1, 128>}, {transform_indices = @transform_7, window_bounds = array<i64: 8, 128>}]} {
    %c0 = arith.constant 0 : index
    %c0_0 = arith.constant 0 : index
    %0 = vector.load %arg1[%c0, %c0_0] : memref<8x64xf32, #tpu.memory_space<vmem>>, vector<8x64xf32>
    %c0_1 = arith.constant 0 : index
    %c0_2 = arith.constant 0 : index
    %1 = vector.load %arg2[%c0_1, %c0_2] : memref<64x128xf32, #tpu.memory_space<vmem>>, vector<64x128xf32>
    %c0_3 = arith.constant 0 : index
    %c0_4 = arith.constant 0 : index
    %2 = vector.load %arg3[%c0_3, %c0_4] : memref<1x128xf32, #tpu.memory_space<vmem>>, vector<1x128xf32>
    %cst = arith.constant dense<0.000000e+00> : vector<8x128xf32>
    %3 = tpu.matmul %0, %1, %cst {dimension_numbers = #tpu.dot_dimension_numbers<[1], [0], [0], [1], [0, 0, 1, 1], [], []>} : vector<8x64xf32>, vector<64x128xf32>, vector<8x128xf32> -> vector<8x128xf32>
    %4 = vector.broadcast %2 : vector<1x128xf32> to vector<8x128xf32>
    %5 = arith.addf %3, %4 : vector<8x128xf32>
    %cst_5 = arith.constant 0.000000e+00 : f32
    %6 = vector.broadcast %cst_5 : f32 to vector<8x128xf32>
    %7 = arith.maximumf %5, %6 : vector<8x128xf32>
    %c0_6 = arith.constant 0 : index
    %c0_7 = arith.constant 0 : index
    %8 = vector.load %arg4[%c0_6, %c0_7] : memref<128x128xf32, #tpu.memory_space<vmem>>, vector<128x128xf32>
    %c0_8 = arith.constant 0 : index
    %c0_9 = arith.constant 0 : index
    %9 = vector.load %arg5[%c0_8, %c0_9] : memref<1x128xf32, #tpu.memory_space<vmem>>, vector<1x128xf32>
    %cst_10 = arith.constant dense<0.000000e+00> : vector<8x128xf32>
    %10 = tpu.matmul %7, %8, %cst_10 {dimension_numbers = #tpu.dot_dimension_numbers<[1], [0], [0], [1], [0, 0, 1, 1], [], []>} : vector<8x128xf32>, vector<128x128xf32>, vector<8x128xf32> -> vector<8x128xf32>
    %11 = vector.broadcast %9 : vector<1x128xf32> to vector<8x128xf32>
    %12 = arith.addf %10, %11 : vector<8x128xf32>
    %cst_11 = arith.constant 0.000000e+00 : f32
    %13 = vector.broadcast %cst_11 : f32 to vector<8x128xf32>
    %14 = arith.maximumf %12, %13 : vector<8x128xf32>
    %c0_12 = arith.constant 0 : index
    %c0_13 = arith.constant 0 : index
    %15 = vector.load %arg6[%c0_12, %c0_13] : memref<128x128xf32, #tpu.memory_space<vmem>>, vector<128x128xf32>
    %c0_14 = arith.constant 0 : index
    %c0_15 = arith.constant 0 : index
    %16 = vector.load %arg7[%c0_14, %c0_15] : memref<1x128xf32, #tpu.memory_space<vmem>>, vector<1x128xf32>
    %cst_16 = arith.constant dense<0.000000e+00> : vector<8x128xf32>
    %17 = tpu.matmul %14, %15, %cst_16 {dimension_numbers = #tpu.dot_dimension_numbers<[1], [0], [0], [1], [0, 0, 1, 1], [], []>} : vector<8x128xf32>, vector<128x128xf32>, vector<8x128xf32> -> vector<8x128xf32>
    %18 = vector.broadcast %16 : vector<1x128xf32> to vector<8x128xf32>
    %19 = arith.addf %17, %18 : vector<8x128xf32>
    %c0_17 = arith.constant 0 : index
    %c0_18 = arith.constant 0 : index
    %20 = vector.load %arg8[%c0_17, %c0_18] : memref<8x128xf32, #tpu.memory_space<vmem>>, vector<8x128xf32>
    tpu.vector_store %arg8[%c0_17, %c0_18], %19 {strides = array<i32>} : memref<8x128xf32, #tpu.memory_space<vmem>>, vector<8x128xf32>,
    return
  }
  func.func @transform_0(%arg0: i32) -> (i32, i32) {
    %c0_i32 = arith.constant 0 : i32
    %c0_i32_0 = arith.constant 0 : i32
    return %arg0, %c0_i32 : i32, i32
  }
  func.func @transform_1(%arg0: i32) -> (i32, i32) {
    %c0_i32 = arith.constant 0 : i32
    %c0_i32_0 = arith.constant 0 : i32
    %c0_i32_1 = arith.constant 0 : i32
    return %c0_i32, %c0_i32_0 : i32, i32
  }
  func.func @transform_2(%arg0: i32) -> (i32, i32) {
    %c0_i32 = arith.constant 0 : i32
    %c0_i32_0 = arith.constant 0 : i32
    %c0_i32_1 = arith.constant 0 : i32
    return %c0_i32, %c0_i32_0 : i32, i32
  }
  func.func @transform_3(%arg0: i32) -> (i32, i32) {
    %c0_i32 = arith.constant 0 : i32
    %c0_i32_0 = arith.constant 0 : i32
    %c0_i32_1 = arith.constant 0 : i32
    return %c0_i32, %c0_i32_0 : i32, i32
  }
  func.func @transform_4(%arg0: i32) -> (i32, i32) {
    %c0_i32 = arith.constant 0 : i32
    %c0_i32_0 = arith.constant 0 : i32
    %c0_i32_1 = arith.constant 0 : i32
    return %c0_i32, %c0_i32_0 : i32, i32
  }
  func.func @transform_5(%arg0: i32) -> (i32, i32) {
    %c0_i32 = arith.constant 0 : i32
    %c0_i32_0 = arith.constant 0 : i32
    %c0_i32_1 = arith.constant 0 : i32
    return %c0_i32, %c0_i32_0 : i32, i32
  }
  func.func @transform_6(%arg0: i32) -> (i32, i32) {
    %c0_i32 = arith.constant 0 : i32
    %c0_i32_0 = arith.constant 0 : i32
    %c0_i32_1 = arith.constant 0 : i32
    return %c0_i32, %c0_i32_0 : i32, i32
  }
  func.func @transform_7(%arg0: i32) -> (i32, i32) {
    %c0_i32 = arith.constant 0 : i32
    %c0_i32_0 = arith.constant 0 : i32
    return %arg0, %c0_i32 : i32, i32
  }
}

</mosaic_0001>

<llo_original>
// kernel: tpu_custom_call.1
$region0: #{tpu_custom_call.1}
  #allocation0 [shape = 'u32[]', space=smem, size = 0x4, offset = 0x4, fixed_abs, tag = 'smem constant byte address 0x4 - core index']
  #allocation1 [shape = 'u32[144,128]{1,0:T(1,128)}', space=vmem, size = 0x12000, scoped, tag = 'internal scratch']
  %s0 = inlined_call_operand.hbm [shape: f32[16,64], index: 0, kind: input, shape index: {}]
  %s1 = inlined_call_operand.hbm [shape: f32[64,128], index: 1, kind: input, shape index: {}]
  %s2 = inlined_call_operand.vmem [shape: f32[1,128], index: 2, kind: input, shape index: {}]
  %s3 = inlined_call_operand.hbm [shape: f32[128,128], index: 3, kind: input, shape index: {}]
  %s4 = inlined_call_operand.vmem [shape: f32[1,128], index: 4, kind: input, shape index: {}]
  %s5 = inlined_call_operand.hbm [shape: f32[128,128], index: 5, kind: input, shape index: {}]
  %s6 = inlined_call_operand.vmem [shape: f32[1,128], index: 6, kind: input, shape index: {}]
  %s7 = inlined_call_operand.hbm [shape: f32[16,128], index: 7, kind: output, shape index: {}]
  %s8 = sld [smem:[#allocation0]]
  $region77: #{tpu_custom_call.1} parent=0
    _
  %s10 = ssub.s32 1, %s8
  %s11 = scalar_select 0, %s10, %s8
  $region1: #{tpu_custom_call.1} parent=0
    #allocation2 [shape = 'u8[8192]{0}', space=vmem, size = 0x2000, scoped, tag = 'input window, operand 0']
    #allocation3 [shape = 's32[2]{0}', space=sflag, size = 0x8, scoped, tag = 'scoped memory for tpu_custom_call.1']
    #allocation4 [shape = 's32[2]{0}', space=sflag, size = 0x8, scoped, tag = 'scoped memory for tpu_custom_call.1']
    #allocation5 [shape = 'u8[32768]{0}', space=vmem, size = 0x8000, scoped, tag = 'input window, operand 1, single buffered']
    #allocation6 [shape = 's32[1]{0}', space=sflag, size = 0x4, scoped, tag = 'scoped memory for tpu_custom_call.1']
    #allocation7 [shape = 'u8[65536]{0}', space=vmem, size = 0x10000, scoped, tag = 'input window, operand 3, single buffered']
    #allocation8 [shape = 'u8[65536]{0}', space=vmem, size = 0x10000, scoped, tag = 'input window, operand 5, single buffered']
    #allocation9 [shape = 's32[1]{0}', space=sflag, size = 0x4, scoped, tag = 'scoped memory for tpu_custom_call.1']
    #allocation10 [shape = 'u8[8192]{0}', space=vmem, size = 0x2000, scoped, tag = 'output window, operand 0']
    %12 = vsyncpa [#allocation3], 0
    %s13 = scalar_lea.sflag [#allocation3], 1
    %14 = vsyncpa %s13, 0
    %15 = vsyncpa [#allocation6], 0
    %16 = vsyncpa [#allocation9], 0
    %17 = vsyncpa [#allocation4], 0
    %s18 = scalar_lea.sflag [#allocation4], 1
    %19 = vsyncpa %s18, 0
    loop: start=0, step=1, limit=4
    $region2: #{tpu_custom_call.1} parent=1 // loop_pre_header
      _
    $region3: #{tpu_custom_call.1} parent=1 // loop_header
      %s21 = sphi 0, %s25
      %p22 = scmp.ge.s32.totalorder %s21, 4
      %s31 = sphi 0, %s33
      %s34 = sphi 0, %s31
      %s35 = sphi 0, %s34
      %s51 = sphi 0, %s35
      %s55 = sphi 0, %s55
      %s57 = sphi 0, %s55
      %s58 = sphi 0, %s57
      %s72 = sphi 0, %s58
      %s76 = sphi 0, %s76
      %s78 = sphi 0, %s76
      %s79 = sphi 0, %s78
      %s93 = sphi 0, %s79
      %s97 = sphi 0, %s97
      %s99 = sphi 0, %s97
      %s100 = sphi 0, %s99
      %s114 = sphi 0, %s100
      %s118 = sphi 0, %s118
      %s120 = sphi 0, %s118
      %s121 = sphi 0, %s120
      %s135 = sphi 0, %s121
      %s139 = sphi 0, %s139
      %s141 = sphi 0, %s139
      %s142 = sphi 0, %s141
      %s156 = sphi 0, %s142
      %s160 = sphi 0, %s160
      %s162 = sphi 0, %s160
      %s163 = sphi 0, %s162
      %s177 = sphi 0, %s163
      %s183 = sphi 0, %s185
      %s186 = sphi 0, %s183
      %s187 = sphi 0, %s186
      %s203 = sphi 0, %s187
    $region4: #{tpu_custom_call.1} parent=1 // loop_header_branch
      %24 = sbr.rel (%p22) target = $region8
    $region5: #{tpu_custom_call.1} parent=1 // loop_body
      %s26 = ssub.s32 %s21, 1
      %s27 = ssub.s32 %s21, 2
      %s28 = sadd.s32 %s21, 1
      %s29 = ssub.s32 %s21, %s28
      %p30 = scmp.eq.s32.totalorder %s29, 0
      %s32 = sadd.s32 %s31, 1
      %s33 = scalar_select %p30, %s31, %s32
      %p36 = pneg %p30
      %p37 = scmp.eq.s32.totalorder %s21, 1
      %p38 = por %p36, %p37
      %p39 = scmp.ne.s32.totalorder %s31, %s34
      %p40 = scmp.eq.s32.totalorder %s21, 0
      %p41 = por %p39, %p40
      %p42 = scmp.ne.s32.totalorder %s31, %s34
      %p43 = scmp.eq.s32.totalorder %s26, 1
      %p44 = por %p42, %p43
      %p45 = scmp.ne.s32.totalorder %s34, %s35
      %p46 = scmp.eq.s32.totalorder %s26, 0
      %p47 = por %p45, %p46
      %p48 = scmp.ne.s32.totalorder %s34, %s35
      %p49 = scmp.eq.s32.totalorder %s27, 1
      %p50 = por %p48, %p49
      %p52 = scmp.ne.s32.totalorder %s35, %s51
      %p53 = scmp.eq.s32.totalorder %s27, 0
      %p54 = por %p52, %p53
      %s56 = sadd.s32 %s55, 1
      %p59 = scmp.eq.s32.totalorder %s21, 1
      %p60 = scmp.ne.s32.totalorder %s55, %s57
      %p61 = scmp.eq.s32.totalorder %s21, 0
      %p62 = por %p60, %p61
      %p63 = scmp.ne.s32.totalorder %s55, %s57
      %p64 = scmp.eq.s32.totalorder %s26, 1
      %p65 = por %p63, %p64
      %p66 = scmp.ne.s32.totalorder %s57, %s58
      %p67 = scmp.eq.s32.totalorder %s26, 0
      %p68 = por %p66, %p67
      %p69 = scmp.ne.s32.totalorder %s57, %s58
      %p70 = scmp.eq.s32.totalorder %s27, 1
      %p71 = por %p69, %p70
      %p73 = scmp.ne.s32.totalorder %s58, %s72
      %p74 = scmp.eq.s32.totalorder %s27, 0
      %p75 = por %p73, %p74
      %s77 = sadd.s32 %s76, 1
      %p80 = scmp.eq.s32.totalorder %s21, 1
      %p81 = scmp.ne.s32.totalorder %s76, %s78
      %p82 = scmp.eq.s32.totalorder %s21, 0
      %p83 = por %p81, %p82
      %p84 = scmp.ne.s32.totalorder %s76, %s78
      %p85 = scmp.eq.s32.totalorder %s26, 1
      %p86 = por %p84, %p85
      %p87 = scmp.ne.s32.totalorder %s78, %s79
      %p88 = scmp.eq.s32.totalorder %s26, 0
      %p89 = por %p87, %p88
      %p90 = scmp.ne.s32.totalorder %s78, %s79
      %p91 = scmp.eq.s32.totalorder %s27, 1
      %p92 = por %p90, %p91
      %p94 = scmp.ne.s32.totalorder %s79, %s93
      %p95 = scmp.eq.s32.totalorder %s27, 0
      %p96 = por %p94, %p95
      %s98 = sadd.s32 %s97, 1
      %p101 = scmp.eq.s32.totalorder %s21, 1
      %p102 = scmp.ne.s32.totalorder %s97, %s99
      %p103 = scmp.eq.s32.totalorder %s21, 0
      %p104 = por %p102, %p103
      %p105 = scmp.ne.s32.totalorder %s97, %s99
      %p106 = scmp.eq.s32.totalorder %s26, 1
      %p107 = por %p105, %p106
      %p108 = scmp.ne.s32.totalorder %s99, %s100
      %p109 = scmp.eq.s32.totalorder %s26, 0
      %p110 = por %p108, %p109
      %p111 = scmp.ne.s32.totalorder %s99, %s100
      %p112 = scmp.eq.s32.totalorder %s27, 1
      %p113 = por %p111, %p112
      %p115 = scmp.ne.s32.totalorder %s100, %s114
      %p116 = scmp.eq.s32.totalorder %s27, 0
      %p117 = por %p115, %p116
      %s119 = sadd.s32 %s118, 1
      %p122 = scmp.eq.s32.totalorder %s21, 1
      %p123 = scmp.ne.s32.totalorder %s118, %s120
      %p124 = scmp.eq.s32.totalorder %s21, 0
      %p125 = por %p123, %p124
      %p126 = scmp.ne.s32.totalorder %s118, %s120
      %p127 = scmp.eq.s32.totalorder %s26, 1
      %p128 = por %p126, %p127
      %p129 = scmp.ne.s32.totalorder %s120, %s121
      %p130 = scmp.eq.s32.totalorder %s26, 0
      %p131 = por %p129, %p130
      %p132 = scmp.ne.s32.totalorder %s120, %s121
      %p133 = scmp.eq.s32.totalorder %s27, 1
      %p134 = por %p132, %p133
      %p136 = scmp.ne.s32.totalorder %s121, %s135
      %p137 = scmp.eq.s32.totalorder %s27, 0
      %p138 = por %p136, %p137
      %s140 = sadd.s32 %s139, 1
      %p143 = scmp.eq.s32.totalorder %s21, 1
      %p144 = scmp.ne.s32.totalorder %s139, %s141
      %p145 = scmp.eq.s32.totalorder %s21, 0
      %p146 = por %p144, %p145
      %p147 = scmp.ne.s32.totalorder %s139, %s141
      %p148 = scmp.eq.s32.totalorder %s26, 1
      %p149 = por %p147, %p148
      %p150 = scmp.ne.s32.totalorder %s141, %s142
      %p151 = scmp.eq.s32.totalorder %s26, 0
      %p152 = por %p150, %p151
      %p153 = scmp.ne.s32.totalorder %s141, %s142
      %p154 = scmp.eq.s32.totalorder %s27, 1
      %p155 = por %p153, %p154
      %p157 = scmp.ne.s32.totalorder %s142, %s156
      %p158 = scmp.eq.s32.totalorder %s27, 0
      %p159 = por %p157, %p158
      %s161 = sadd.s32 %s160, 1
      %p164 = scmp.eq.s32.totalorder %s21, 1
      %p165 = scmp.ne.s32.totalorder %s160, %s162
      %p166 = scmp.eq.s32.totalorder %s21, 0
      %p167 = por %p165, %p166
      %p168 = scmp.ne.s32.totalorder %s160, %s162
      %p169 = scmp.eq.s32.totalorder %s26, 1
      %p170 = por %p168, %p169
      %p171 = scmp.ne.s32.totalorder %s162, %s163
      %p172 = scmp.eq.s32.totalorder %s26, 0
      %p173 = por %p171, %p172
      %p174 = scmp.ne.s32.totalorder %s162, %s163
      %p175 = scmp.eq.s32.totalorder %s27, 1
      %p176 = por %p174, %p175
      %p178 = scmp.ne.s32.totalorder %s163, %s177
      %p179 = scmp.eq.s32.totalorder %s27, 0
      %p180 = por %p178, %p179
      %s181 = ssub.s32 %s21, %s28
      %p182 = scmp.eq.s32.totalorder %s181, 0
      %s184 = sadd.s32 %s183, 1
      %s185 = scalar_select %p182, %s183, %s184
      %p188 = pneg %p182
      %p189 = scmp.eq.s32.totalorder %s21, 1
      %p190 = por %p188, %p189
      %p191 = scmp.ne.s32.totalorder %s183, %s186
      %p192 = scmp.eq.s32.totalorder %s21, 0
      %p193 = por %p191, %p192
      %p194 = scmp.ne.s32.totalorder %s183, %s186
      %p195 = scmp.eq.s32.totalorder %s26, 1
      %p196 = por %p194, %p195
      %p197 = scmp.ne.s32.totalorder %s186, %s187
      %p198 = scmp.eq.s32.totalorder %s26, 0
      %p199 = por %p197, %p198
      %p200 = scmp.ne.s32.totalorder %s186, %s187
      %p201 = scmp.eq.s32.totalorder %s27, 1
      %p202 = por %p200, %p201
      %p204 = scmp.ne.s32.totalorder %s187, %s203
      %p205 = scmp.eq.s32.totalorder %s27, 0
      %p206 = por %p204, %p205
      %p207 = scmp.le.s32.totalorder 1, %s21
      %p208 = scmp.lt.s32.totalorder %s21, 3
      %p209 = pnand %p207, %p208
      %p210 = pneg %p209
      // Predicated region
      $region9: #{tpu_custom_call.1} parent=5 // pred_check
        _
      $region10: #{tpu_custom_call.1} parent=5 // pred_check_branch
        %212 = sbr.rel (%p209) target = $region12
      $region11: #{tpu_custom_call.1} parent=5 // pred_region
        %s213 = ssub.s32 %s21, 1
        // Predicated region
        $region13: #{tpu_custom_call.1} parent=11 // pred_check
          %p214 = pneg %p68
        $region14: #{tpu_custom_call.1} parent=11 // pred_check_branch
          %216 = sbr.rel (%p214) target = $region16
        $region15: #{tpu_custom_call.1} parent=11 // pred_region
          %s218 = ssub.s32 1024, 1024
          %219 = vsyncadd [#allocation6], %s218
          %s220 = sshll.u32 [#allocation5], 4
          %s221 = int_to_ptr.vmem [resolvable:$true] %s220
          %226 = dma.hbm_to_vmem [thread:$0]  %s1, 1024, %s221, [#allocation6], 128, 128, 8
        $region16: #{tpu_custom_call.1} parent=11 // pred_fallthru
          _
        // Predicated region
        $region17: #{tpu_custom_call.1} parent=11 // pred_check
          %p227 = pneg %p89
        $region18: #{tpu_custom_call.1} parent=11 // pred_check_branch
          %229 = sbr.rel (%p227) target = $region20
        $region19: #{tpu_custom_call.1} parent=11 // pred_region
          _
        $region20: #{tpu_custom_call.1} parent=11 // pred_fallthru
          _
        // Predicated region
        $region21: #{tpu_custom_call.1} parent=11 // pred_check
          %p230 = pneg %p110
        $region22: #{tpu_custom_call.1} parent=11 // pred_check_branch
          %232 = sbr.rel (%p230) target = $region24
        $region23: #{tpu_custom_call.1} parent=11 // pred_region
          %s234 = ssub.s32 2048, 2048
          %235 = vsyncadd [#allocation6], %s234
          %s236 = sshll.u32 [#allocation7], 4
          %s237 = int_to_ptr.vmem [resolvable:$true] %s236
          %242 = dma.hbm_to_vmem [thread:$0]  %s3, 2048, %s237, [#allocation6], 128, 128, 8
        $region24: #{tpu_custom_call.1} parent=11 // pred_fallthru
          _
        // Predicated region
        $region25: #{tpu_custom_call.1} parent=11 // pred_check
          %p243 = pneg %p131
        $region26: #{tpu_custom_call.1} parent=11 // pred_check_branch
          %245 = sbr.rel (%p243) target = $region28
        $region27: #{tpu_custom_call.1} parent=11 // pred_region
          _
        $region28: #{tpu_custom_call.1} parent=11 // pred_fallthru
          _
        // Predicated region
        $region29: #{tpu_custom_call.1} parent=11 // pred_check
          %p246 = pneg %p152
        $region30: #{tpu_custom_call.1} parent=11 // pred_check_branch
          %248 = sbr.rel (%p246) target = $region32
        $region31: #{tpu_custom_call.1} parent=11 // pred_region
          %s250 = ssub.s32 2048, 2048
          %251 = vsyncadd [#allocation9], %s250
          %s252 = sshll.u32 [#allocation8], 4
          %s253 = int_to_ptr.vmem [resolvable:$true] %s252
          %258 = dma.hbm_to_vmem [thread:$0]  %s5, 2048, %s253, [#allocation9], 128, 128, 8
        $region32: #{tpu_custom_call.1} parent=11 // pred_fallthru
          _
        // Predicated region
        $region33: #{tpu_custom_call.1} parent=11 // pred_check
          %p259 = pneg %p173
        $region34: #{tpu_custom_call.1} parent=11 // pred_check_branch
          %261 = sbr.rel (%p259) target = $region36
        $region35: #{tpu_custom_call.1} parent=11 // pred_region
          _
        $region36: #{tpu_custom_call.1} parent=11 // pred_fallthru
          _
      $region12: #{tpu_custom_call.1} parent=5 // pred_fallthru
        _
      %p262 = scmp.lt.s32.totalorder %s21, 2
      // Predicated region
      $region37: #{tpu_custom_call.1} parent=5 // pred_check
        %p263 = pneg %p262
      $region38: #{tpu_custom_call.1} parent=5 // pred_check_branch
        %265 = sbr.rel (%p263) target = $region40
      $region39: #{tpu_custom_call.1} parent=5 // pred_region
        // Predicated region
        $region41: #{tpu_custom_call.1} parent=39 // pred_check
          %p266 = pneg %p41
        $region42: #{tpu_custom_call.1} parent=39 // pred_check_branch
          %268 = sbr.rel (%p266) target = $region44
        $region43: #{tpu_custom_call.1} parent=39 // pred_region
          %s269 = sand.u32 %s31, 1
          %s270 = scalar_lea.sflag [#allocation3], %s269
          %s271 = sand.u32 %s31, 1
          %s272 = smul.addr %s271, 8
          %s273 = scalar_lea.vmem [#allocation2], %s272
          %s275 = ssub.s32 128, 128
          %276 = vsyncadd %s270, %s275
          %s277 = smul.addr %s21, 128
          %s278 = scalar_lea.hbm %s0, %s277
          %s280 = sshll.u32 %s273, 4
          %s281 = int_to_ptr.vmem [resolvable:$true] %s280
          %283 = dma.hbm_to_vmem [thread:$0]  %s278, 128, %s281, %s270
        $region44: #{tpu_custom_call.1} parent=39 // pred_fallthru
          _
      $region40: #{tpu_custom_call.1} parent=5 // pred_fallthru
        _
      %p284 = scmp.le.s32.totalorder 1, %s21
      %p285 = scmp.lt.s32.totalorder %s21, 3
      %p286 = pnand %p284, %p285
      %p287 = pneg %p286
      // Predicated region
      $region45: #{tpu_custom_call.1} parent=5 // pred_check
        _
      $region46: #{tpu_custom_call.1} parent=5 // pred_check_branch
        %289 = sbr.rel (%p286) target = $region48
      $region47: #{tpu_custom_call.1} parent=5 // pred_region
        %s290 = ssub.s32 %s21, 1
        %s291 = sand.u32 %s34, 1
        %s292 = scalar_lea.sflag [#allocation3], %s291
        %s293 = sand.u32 %s34, 1
        %s294 = smul.addr %s293, 8
        %s295 = scalar_lea.vmem [#allocation2], %s294
        // Predicated region
        $region49: #{tpu_custom_call.1} parent=47 // pred_check
          %p296 = pneg %p47
        $region50: #{tpu_custom_call.1} parent=47 // pred_check_branch
          %298 = sbr.rel (%p296) target = $region52
        $region51: #{tpu_custom_call.1} parent=47 // pred_region
          %299 = dma.done %s292, 128
        $region52: #{tpu_custom_call.1} parent=47 // pred_fallthru
          _
        // Predicated region
        $region53: #{tpu_custom_call.1} parent=47 // pred_check
          %p300 = pneg %p68
        $region54: #{tpu_custom_call.1} parent=47 // pred_check_branch
          %302 = sbr.rel (%p300) target = $region56
        $region55: #{tpu_custom_call.1} parent=47 // pred_region
          %303 = dma.done [#allocation6], 1024
        $region56: #{tpu_custom_call.1} parent=47 // pred_fallthru
          _
        // Predicated region
        $region57: #{tpu_custom_call.1} parent=47 // pred_check
          %p304 = pneg %p110
        $region58: #{tpu_custom_call.1} parent=47 // pred_check_branch
          %306 = sbr.rel (%p304) target = $region60
        $region59: #{tpu_custom_call.1} parent=47 // pred_region
          %307 = dma.done [#allocation6], 2048
        $region60: #{tpu_custom_call.1} parent=47 // pred_fallthru
          _
        // Predicated region
        $region61: #{tpu_custom_call.1} parent=47 // pred_check
          %p308 = pneg %p152
        $region62: #{tpu_custom_call.1} parent=47 // pred_check_branch
          %310 = sbr.rel (%p308) target = $region64
        $region63: #{tpu_custom_call.1} parent=47 // pred_region
          %311 = dma.done [#allocation9], 2048
        $region64: #{tpu_custom_call.1} parent=47 // pred_fallthru
          _
        %s312 = sand.u32 %s34, 1
        %s313 = scalar_lea.sflag [#allocation3], %s312
        %s314 = sand.u32 %s34, 1
        %s315 = smul.addr %s314, 8
        %s316 = scalar_lea.vmem [#allocation2], %s315
        %p317 = pneg %p47
        %p318 = pneg %p44
        %p319 = pneg %p68
        %p320 = pneg %p65
        %p321 = pneg %p89
        %p322 = pneg %p86
        %p323 = pneg %p110
        %p324 = pneg %p107
        %p325 = pneg %p131
        %p326 = pneg %p128
        %p327 = pneg %p152
        %p328 = pneg %p149
        %p329 = pneg %p173
        %p330 = pneg %p170
        %p331 = pneg %p199
        %p332 = pneg %p196
        %s333 = sand.u32 %s186, 1
        %s334 = scalar_lea.sflag [#allocation4], %s333
        %s335 = sand.u32 %s186, 1
        %s336 = smul.addr %s335, 8
        %s337 = scalar_lea.vmem [#allocation10], %s336
        %v338 = vld [vmem:[%s295] sm:$0xff]
        %v339 = vld [vmem:[#allocation5] sm:$0xff]
        %v340 = vld [vmem:[#allocation5 + $0x8] sm:$0xff]
        %v341 = vld [vmem:[#allocation5 + $0x10] sm:$0xff]
        %v342 = vld [vmem:[#allocation5 + $0x18] sm:$0xff]
        %v343 = vld [vmem:[#allocation5 + $0x20] sm:$0xff]
        %v344 = vld [vmem:[#allocation5 + $0x28] sm:$0xff]
        %v345 = vld [vmem:[#allocation5 + $0x30] sm:$0xff]
        %v346 = vld [vmem:[#allocation5 + $0x38] sm:$0xff]
        %v347 = vld [vmem:[%s2] sm:$0x1]
        %v349 = vlaneseq
        %v350 = vshrl.u32 %v349, 7
        %v351 = vsub.s32 0, %v350
        %v352 = vrot.slane %v347, %v351
        %vm354 = vcmask 523264
        %v356 = vsel %vm354, %v338, 0
        %358 = vmatprep.subr.mxu0 0.0
        %359 = vmatpush1.msra.mxu0 %v339
        %360 = vmatprep.subr.mxu0 0.0
        %361 = vmatpush1.msra.mxu0 %v340
        %362 = vmatprep.subr.mxu0 0.0
        %363 = vmatpush1.msra.mxu0 %v341
        %364 = vmatprep.subr.mxu0 0.0
        %365 = vmatpush1.msra.mxu0 %v342
        %366 = vmatprep.subr.mxu0 0.0
        %367 = vmatpush1.msra.mxu0 %v343
        %368 = vmatprep.subr.mxu0 0.0
        %369 = vmatpush1.msra.mxu0 %v344
        %370 = vmatprep.subr.mxu0 0.0
        %371 = vmatpush1.msra.mxu0 %v345
        %372 = vmatprep.subr.mxu0 0.0
        %373 = vmatpush1.msra.mxu0 %v346
        %374 = vmatprep.subr.mxu0 0.0
        %375 = vmatpush1.msra.mxu0 0.0
        %376 = vmatprep.subr.mxu0 0.0
        %377 = vmatpush1.msra.mxu0 0.0
        %378 = vmatprep.subr.mxu0 0.0
        %379 = vmatpush1.msra.mxu0 0.0
        %380 = vmatprep.subr.mxu0 0.0
        %381 = vmatpush1.msra.mxu0 0.0
        %382 = vmatprep.subr.mxu0 0.0
        %383 = vmatpush1.msra.mxu0 0.0
        %384 = vmatprep.subr.mxu0 0.0
        %385 = vmatpush1.msra.mxu0 0.0
        %386 = vmatprep.subr.mxu0 0.0
        %387 = vmatpush1.msra.mxu0 0.0
        %388 = vmatprep.subr.mxu0 0.0
        %389 = vmatpush1.msra.mxu0 0.0
        %390 = vmatprep.subr.mxu0 0.0
        %391 = vmatpush1.msra.mxu0 0.0
        %392 = vmatprep.subr.mxu0 0.0
        %393 = vmatpush1.msra.mxu0 0.0
        %394 = vmatprep.subr.mxu0 0.0
        %395 = vmatpush1.msra.mxu0 0.0
        %396 = vmatprep.subr.mxu0 0.0
        %397 = vmatpush1.msra.mxu0 0.0
        %398 = vmatprep.subr.mxu0 0.0
        %399 = vmatpush1.msra.mxu0 0.0
        %400 = vmatprep.subr.mxu0 0.0
        %401 = vmatpush1.msra.mxu0 0.0
        %402 = vmatprep.subr.mxu0 0.0
        %403 = vmatpush1.msra.mxu0 0.0
        %404 = vmatprep.subr.mxu0 0.0
        %405 = vmatpush1.msra.mxu0 0.0
        %406 = vmatprep.subr.mxu0 0.0
        %407 = vmatpush1.msra.mxu0 0.0
        %408 = vmatprep.subr.mxu0 0.0
        %409 = vmatpush1.msra.mxu0 0.0
        %410 = vmatprep.subr.mxu0 0.0
        %411 = vmatpush1.msra.mxu0 0.0
        %412 = vmatprep.subr.mxu0 0.0
        %413 = vmatpush1.msra.mxu0 0.0
        %414 = vmatprep.subr.mxu0 0.0
        %415 = vmatpush1.msra.mxu0 0.0
        %416 = vmatprep.subr.mxu0 0.0
        %417 = vmatpush1.msra.mxu0 0.0
        %418 = vmatprep.subr.mxu0 0.0
        %419 = vmatpush1.msra.mxu0 0.0
        %420 = vmatprep.subr.mxu0 0.0
        %421 = vmatpush1.msra.mxu0 0.0
        %422 = vmatprep.mubr.f32.mxu0 0.0
        %423 = vmatmul.mubr.f32.gmra.mrb[0].mxu0 %v356
        %v424 = vpop.f32.mrb[0].mxu0
        %v425 = vadd.f32 %v352, %v424
        %v426 = vpop.f32.mrb[0].mxu0
        %427 = vdwg.mxu0
        %v428 = vmax.f32 %v425, 0.0
        %v429 = vld [vmem:[#allocation7] sm:$0xff]
        %v430 = vld [vmem:[#allocation7 + $0x8] sm:$0xff]
        %v431 = vld [vmem:[#allocation7 + $0x10] sm:$0xff]
        %v432 = vld [vmem:[#allocation7 + $0x18] sm:$0xff]
        %v433 = vld [vmem:[#allocation7 + $0x20] sm:$0xff]
        %v434 = vld [vmem:[#allocation7 + $0x28] sm:$0xff]
        %v435 = vld [vmem:[#allocation7 + $0x30] sm:$0xff]
        %v436 = vld [vmem:[#allocation7 + $0x38] sm:$0xff]
        %v437 = vld [vmem:[#allocation7 + $0x40] sm:$0xff]
        %v438 = vld [vmem:[#allocation7 + $0x48] sm:$0xff]
        %v439 = vld [vmem:[#allocation7 + $0x50] sm:$0xff]
        %v440 = vld [vmem:[#allocation7 + $0x58] sm:$0xff]
        %v441 = vld [vmem:[#allocation7 + $0x60] sm:$0xff]
        %v442 = vld [vmem:[#allocation7 + $0x68] sm:$0xff]
        %v443 = vld [vmem:[#allocation7 + $0x70] sm:$0xff]
        %v444 = vld [vmem:[#allocation7 + $0x78] sm:$0xff]
        %v445 = vld [vmem:[%s4] sm:$0x1]
        %v447 = vlaneseq
        %v448 = vshrl.u32 %v447, 7
        %v449 = vsub.s32 0, %v448
        %v450 = vrot.slane %v445, %v449
        %452 = vmatprep.subr.mxu0 0.0
        %453 = vmatpush1.msra.mxu0 %v429
        %454 = vmatprep.subr.mxu0 0.0
        %455 = vmatpush1.msra.mxu0 %v430
        %456 = vmatprep.subr.mxu0 0.0
        %457 = vmatpush1.msra.mxu0 %v431
        %458 = vmatprep.subr.mxu0 0.0
        %459 = vmatpush1.msra.mxu0 %v432
        %460 = vmatprep.subr.mxu0 0.0
        %461 = vmatpush1.msra.mxu0 %v433
        %462 = vmatprep.subr.mxu0 0.0
        %463 = vmatpush1.msra.mxu0 %v434
        %464 = vmatprep.subr.mxu0 0.0
        %465 = vmatpush1.msra.mxu0 %v435
        %466 = vmatprep.subr.mxu0 0.0
        %467 = vmatpush1.msra.mxu0 %v436
        %468 = vmatprep.subr.mxu0 0.0
        %469 = vmatpush1.msra.mxu0 %v437
        %470 = vmatprep.subr.mxu0 0.0
        %471 = vmatpush1.msra.mxu0 %v438
        %472 = vmatprep.subr.mxu0 0.0
        %473 = vmatpush1.msra.mxu0 %v439
        %474 = vmatprep.subr.mxu0 0.0
        %475 = vmatpush1.msra.mxu0 %v440
        %476 = vmatprep.subr.mxu0 0.0
        %477 = vmatpush1.msra.mxu0 %v441
        %478 = vmatprep.subr.mxu0 0.0
        %479 = vmatpush1.msra.mxu0 %v442
        %480 = vmatprep.subr.mxu0 0.0
        %481 = vmatpush1.msra.mxu0 %v443
        %482 = vmatprep.subr.mxu0 0.0
        %483 = vmatpush1.msra.mxu0 %v444
        %484 = vmatprep.subr.mxu0 0.0
        %485 = vmatpush1.msra.mxu0 0.0
        %486 = vmatprep.subr.mxu0 0.0
        %487 = vmatpush1.msra.mxu0 0.0
        %488 = vmatprep.subr.mxu0 0.0
        %489 = vmatpush1.msra.mxu0 0.0
        %490 = vmatprep.subr.mxu0 0.0
        %491 = vmatpush1.msra.mxu0 0.0
        %492 = vmatprep.subr.mxu0 0.0
        %493 = vmatpush1.msra.mxu0 0.0
        %494 = vmatprep.subr.mxu0 0.0
        %495 = vmatpush1.msra.mxu0 0.0
        %496 = vmatprep.subr.mxu0 0.0
        %497 = vmatpush1.msra.mxu0 0.0
        %498 = vmatprep.subr.mxu0 0.0
        %499 = vmatpush1.msra.mxu0 0.0
        %500 = vmatprep.subr.mxu0 0.0
        %501 = vmatpush1.msra.mxu0 0.0
        %502 = vmatprep.subr.mxu0 0.0
        %503 = vmatpush1.msra.mxu0 0.0
        %504 = vmatprep.subr.mxu0 0.0
        %505 = vmatpush1.msra.mxu0 0.0
        %506 = vmatprep.subr.mxu0 0.0
        %507 = vmatpush1.msra.mxu0 0.0
        %508 = vmatprep.subr.mxu0 0.0
        %509 = vmatpush1.msra.mxu0 0.0
        %510 = vmatprep.subr.mxu0 0.0
        %511 = vmatpush1.msra.mxu0 0.0
        %512 = vmatprep.subr.mxu0 0.0
        %513 = vmatpush1.msra.mxu0 0.0
        %514 = vmatprep.subr.mxu0 0.0
        %515 = vmatpush1.msra.mxu0 0.0
        %516 = vmatprep.mubr.f32.mxu0 0.0
        %517 = vmatmul.mubr.f32.gmra.mrb[0].mxu0 %v428
        %v518 = vpop.f32.mrb[0].mxu0
        %v519 = vadd.f32 %v450, %v518
        %v520 = vpop.f32.mrb[0].mxu0
        %521 = vdwg.mxu0
        %v522 = vmax.f32 %v519, 0.0
        %v523 = vld [vmem:[#allocation8] sm:$0xff]
        %v524 = vld [vmem:[#allocation8 + $0x8] sm:$0xff]
        %v525 = vld [vmem:[#allocation8 + $0x10] sm:$0xff]
        %v526 = vld [vmem:[#allocation8 + $0x18] sm:$0xff]
        %v527 = vld [vmem:[#allocation8 + $0x20] sm:$0xff]
        %v528 = vld [vmem:[#allocation8 + $0x28] sm:$0xff]
        %v529 = vld [vmem:[#allocation8 + $0x30] sm:$0xff]
        %v530 = vld [vmem:[#allocation8 + $0x38] sm:$0xff]
        %v531 = vld [vmem:[#allocation8 + $0x40] sm:$0xff]
        %v532 = vld [vmem:[#allocation8 + $0x48] sm:$0xff]
        %v533 = vld [vmem:[#allocation8 + $0x50] sm:$0xff]
        %v534 = vld [vmem:[#allocation8 + $0x58] sm:$0xff]
        %v535 = vld [vmem:[#allocation8 + $0x60] sm:$0xff]
        %v536 = vld [vmem:[#allocation8 + $0x68] sm:$0xff]
        %v537 = vld [vmem:[#allocation8 + $0x70] sm:$0xff]
        %v538 = vld [vmem:[#allocation8 + $0x78] sm:$0xff]
        %v539 = vld [vmem:[%s6] sm:$0x1]
        %v541 = vlaneseq
        %v542 = vshrl.u32 %v541, 7
        %v543 = vsub.s32 0, %v542
        %v544 = vrot.slane %v539, %v543
        %546 = vmatprep.subr.mxu0 0.0
        %547 = vmatpush1.msra.mxu0 %v523
        %548 = vmatprep.subr.mxu0 0.0
        %549 = vmatpush1.msra.mxu0 %v524
        %550 = vmatprep.subr.mxu0 0.0
        %551 = vmatpush1.msra.mxu0 %v525
        %552 = vmatprep.subr.mxu0 0.0
        %553 = vmatpush1.msra.mxu0 %v526
        %554 = vmatprep.subr.mxu0 0.0
        %555 = vmatpush1.msra.mxu0 %v527
        %556 = vmatprep.subr.mxu0 0.0
        %557 = vmatpush1.msra.mxu0 %v528
        %558 = vmatprep.subr.mxu0 0.0
        %559 = vmatpush1.msra.mxu0 %v529
        %560 = vmatprep.subr.mxu0 0.0
        %561 = vmatpush1.msra.mxu0 %v530
        %562 = vmatprep.subr.mxu0 0.0
        %563 = vmatpush1.msra.mxu0 %v531
        %564 = vmatprep.subr.mxu0 0.0
        %565 = vmatpush1.msra.mxu0 %v532
        %566 = vmatprep.subr.mxu0 0.0
        %567 = vmatpush1.msra.mxu0 %v533
        %568 = vmatprep.subr.mxu0 0.0
        %569 = vmatpush1.msra.mxu0 %v534
        %570 = vmatprep.subr.mxu0 0.0
        %571 = vmatpush1.msra.mxu0 %v535
        %572 = vmatprep.subr.mxu0 0.0
        %573 = vmatpush1.msra.mxu0 %v536
        %574 = vmatprep.subr.mxu0 0.0
        %575 = vmatpush1.msra.mxu0 %v537
        %576 = vmatprep.subr.mxu0 0.0
        %577 = vmatpush1.msra.mxu0 %v538
        %578 = vmatprep.subr.mxu0 0.0
        %579 = vmatpush1.msra.mxu0 0.0
        %580 = vmatprep.subr.mxu0 0.0
        %581 = vmatpush1.msra.mxu0 0.0
        %582 = vmatprep.subr.mxu0 0.0
        %583 = vmatpush1.msra.mxu0 0.0
        %584 = vmatprep.subr.mxu0 0.0
        %585 = vmatpush1.msra.mxu0 0.0
        %586 = vmatprep.subr.mxu0 0.0
        %587 = vmatpush1.msra.mxu0 0.0
        %588 = vmatprep.subr.mxu0 0.0
        %589 = vmatpush1.msra.mxu0 0.0
        %590 = vmatprep.subr.mxu0 0.0
        %591 = vmatpush1.msra.mxu0 0.0
        %592 = vmatprep.subr.mxu0 0.0
        %593 = vmatpush1.msra.mxu0 0.0
        %594 = vmatprep.subr.mxu0 0.0
        %595 = vmatpush1.msra.mxu0 0.0
        %596 = vmatprep.subr.mxu0 0.0
        %597 = vmatpush1.msra.mxu0 0.0
        %598 = vmatprep.subr.mxu0 0.0
        %599 = vmatpush1.msra.mxu0 0.0
        %600 = vmatprep.subr.mxu0 0.0
        %601 = vmatpush1.msra.mxu0 0.0
        %602 = vmatprep.subr.mxu0 0.0
        %603 = vmatpush1.msra.mxu0 0.0
        %604 = vmatprep.subr.mxu0 0.0
        %605 = vmatpush1.msra.mxu0 0.0
        %606 = vmatprep.subr.mxu0 0.0
        %607 = vmatpush1.msra.mxu0 0.0
        %608 = vmatprep.subr.mxu0 0.0
        %609 = vmatpush1.msra.mxu0 0.0
        %610 = vmatprep.mubr.f32.mxu0 0.0
        %611 = vmatmul.mubr.f32.gmra.mrb[0].mxu0 %v522
        %v612 = vpop.f32.mrb[0].mxu0
        %v613 = vadd.f32 %v544, %v612
        %v614 = vpop.f32.mrb[0].mxu0
        %615 = vdwg.mxu0
        %616 = vst [vmem:[%s337] sm:$0xff] %v613
        %s617 = sand.u32 %s186, 1
        %s618 = scalar_lea.sflag [#allocation4], %s617
        %s619 = sand.u32 %s186, 1
        %s620 = smul.addr %s619, 8
        %s621 = scalar_lea.vmem [#allocation10], %s620
        // Predicated region
        $region65: #{tpu_custom_call.1} parent=47 // pred_check
          %p622 = pneg %p196
        $region66: #{tpu_custom_call.1} parent=47 // pred_check_branch
          %624 = sbr.rel (%p622) target = $region68
        $region67: #{tpu_custom_call.1} parent=47 // pred_region
          %s626 = ssub.s32 128, 128
          %627 = vsyncadd %s618, %s626
          %s628 = smul.addr %s26, 128
          %s629 = scalar_lea.hbm %s7, %s628
          %s631 = sshll.u32 %s621, 4
          %s632 = int_to_ptr.vmem [resolvable:$true] %s631
          %634 = dma.vmem_to_hbm [thread:$0]  %s632, 128, %s629, %s618
        $region68: #{tpu_custom_call.1} parent=47 // pred_fallthru
          _
      $region48: #{tpu_custom_call.1} parent=5 // pred_fallthru
        _
      %p635 = scmp.le.s32.totalorder 2, %s21
      // Predicated region
      $region69: #{tpu_custom_call.1} parent=5 // pred_check
        %p636 = pneg %p635
      $region70: #{tpu_custom_call.1} parent=5 // pred_check_branch
        %638 = sbr.rel (%p636) target = $region72
      $region71: #{tpu_custom_call.1} parent=5 // pred_region
        %s639 = ssub.s32 %s21, 2
        // Predicated region
        $region73: #{tpu_custom_call.1} parent=71 // pred_check
          %p640 = pneg %p202
        $region74: #{tpu_custom_call.1} parent=71 // pred_check_branch
          %642 = sbr.rel (%p640) target = $region76
        $region75: #{tpu_custom_call.1} parent=71 // pred_region
          %s643 = sand.u32 %s187, 1
          %s644 = scalar_lea.sflag [#allocation4], %s643
          %s645 = sand.u32 %s187, 1
          %s646 = smul.addr %s645, 8
          %s647 = scalar_lea.vmem [#allocation10], %s646
          %648 = dma.done %s644, 128
        $region76: #{tpu_custom_call.1} parent=71 // pred_fallthru
          _
      $region72: #{tpu_custom_call.1} parent=5 // pred_fallthru
        _
    $region6: #{tpu_custom_call.1} parent=1 // loop_footer
      %s25 = sadd.s32 1, %s21
    $region7: #{tpu_custom_call.1} parent=1 // loop_footer_branch
      %20 = sbr.rel target = $region3
    $region8: #{tpu_custom_call.1} parent=1 // loop_exit
      _
    %649 = vsyncpa [#allocation3], 1
    %s650 = scalar_lea.sflag [#allocation3], 1
    %651 = vsyncpa %s650, 1
    %652 = vsyncpa [#allocation6], 1
    %653 = vsyncpa [#allocation9], 1
    %654 = vsyncpa [#allocation4], 1
    %s655 = scalar_lea.sflag [#allocation4], 1
    %656 = vsyncpa %s655, 1

// kernel: tpu_custom_call.1
$region0: #{tpu_custom_call.1}
  #allocation0 [shape = 'u32[]', space=smem, size = 0x4, offset = 0x4, fixed_abs, tag = 'smem constant byte address 0x4 - core index']
  #allocation1 [shape = 'u32[144,128]{1,0:T(1,128)}', space=vmem, size = 0x12000, scoped, tag = 'internal scratch']
  %s0 = inlined_call_operand.hbm [shape: f32[16,64], index: 0, kind: input, shape index: {}]
  %s1 = inlined_call_operand.hbm [shape: f32[64,128], index: 1, kind: input, shape index: {}]
  %s2 = inlined_call_operand.vmem [shape: f32[1,128], index: 2, kind: input, shape index: {}]
  %s3 = inlined_call_operand.hbm [shape: f32[128,128], index: 3, kind: input, shape index: {}]
  %s4 = inlined_call_operand.vmem [shape: f32[1,128], index: 4, kind: input, shape index: {}]
  %s5 = inlined_call_operand.hbm [shape: f32[128,128], index: 5, kind: input, shape index: {}]
  %s6 = inlined_call_operand.vmem [shape: f32[1,128], index: 6, kind: input, shape index: {}]
  %s7 = inlined_call_operand.hbm [shape: f32[16,128], index: 7, kind: output, shape index: {}]
  %s8 = sld [smem:[#allocation0]]
  $region77: #{tpu_custom_call.1} parent=0
    _
  %s10 = ssub.s32 1, %s8
  %s11 = scalar_select 0, %s10, %s8
  $region1: #{tpu_custom_call.1} parent=0
    #allocation2 [shape = 'u8[8192]{0}', space=vmem, size = 0x2000, scoped, tag = 'input window, operand 0']
    #allocation3 [shape = 's32[2]{0}', space=sflag, size = 0x8, scoped, tag = 'scoped memory for tpu_custom_call.1']
    #allocation4 [shape = 's32[2]{0}', space=sflag, size = 0x8, scoped, tag = 'scoped memory for tpu_custom_call.1']
    #allocation5 [shape = 'u8[32768]{0}', space=vmem, size = 0x8000, scoped, tag = 'input window, operand 1, single buffered']
    #allocation6 [shape = 's32[1]{0}', space=sflag, size = 0x4, scoped, tag = 'scoped memory for tpu_custom_call.1']
    #allocation7 [shape = 'u8[65536]{0}', space=vmem, size = 0x10000, scoped, tag = 'input window, operand 3, single buffered']
    #allocation8 [shape = 'u8[65536]{0}', space=vmem, size = 0x10000, scoped, tag = 'input window, operand 5, single buffered']
    #allocation9 [shape = 's32[1]{0}', space=sflag, size = 0x4, scoped, tag = 'scoped memory for tpu_custom_call.1']
    #allocation10 [shape = 'u8[8192]{0}', space=vmem, size = 0x2000, scoped, tag = 'output window, operand 0']
    %12 = vsyncpa [#allocation3], 0
    %s13 = scalar_lea.sflag [#allocation3], 1
    %14 = vsyncpa %s13, 0
    %15 = vsyncpa [#allocation6], 0
    %16 = vsyncpa [#allocation9], 0
    %17 = vsyncpa [#allocation4], 0
    %s18 = scalar_lea.sflag [#allocation4], 1
    %19 = vsyncpa %s18, 0
    loop: start=0, step=1, limit=4
    $region2: #{tpu_custom_call.1} parent=1 // loop_pre_header
      _
    $region3: #{tpu_custom_call.1} parent=1 // loop_header
      %s21 = sphi 0, %s25
      %p22 = scmp.ge.s32.totalorder %s21, 4
      %s31 = sphi 0, %s33
      %s34 = sphi 0, %s31
      %s35 = sphi 0, %s34
      %s51 = sphi 0, %s35
      %s55 = sphi 0, %s55
      %s57 = sphi 0, %s55
      %s58 = sphi 0, %s57
      %s72 = sphi 0, %s58
      %s76 = sphi 0, %s76
      %s78 = sphi 0, %s76
      %s79 = sphi 0, %s78
      %s93 = sphi 0, %s79
      %s97 = sphi 0, %s97
      %s99 = sphi 0, %s97
      %s100 = sphi 0, %s99
      %s114 = sphi 0, %s100
      %s118 = sphi 0, %s118
      %s120 = sphi 0, %s118
      %s121 = sphi 0, %s120
      %s135 = sphi 0, %s121
      %s139 = sphi 0, %s139
      %s141 = sphi 0, %s139
      %s142 = sphi 0, %s141
      %s156 = sphi 0, %s142
      %s160 = sphi 0, %s160
      %s162 = sphi 0, %s160
      %s163 = sphi 0, %s162
      %s177 = sphi 0, %s163
      %s183 = sphi 0, %s185
      %s186 = sphi 0, %s183
      %s187 = sphi 0, %s186
      %s203 = sphi 0, %s187
    $region4: #{tpu_custom_call.1} parent=1 // loop_header_branch
      %24 = sbr.rel (%p22) target = $region8
    $region5: #{tpu_custom_call.1} parent=1 // loop_body
      %s26 = ssub.s32 %s21, 1
      %s27 = ssub.s32 %s21, 2
      %s28 = sadd.s32 %s21, 1
      %s29 = ssub.s32 %s21, %s28
      %p30 = scmp.eq.s32.totalorder %s29, 0
      %s32 = sadd.s32 %s31, 1
      %s33 = scalar_select %p30, %s31, %s32
      %p36 = pneg %p30
      %p37 = scmp.eq.s32.totalorder %s21, 1
      %p38 = por %p36, %p37
      %p39 = scmp.ne.s32.totalorder %s31, %s34
      %p40 = scmp.eq.s32.totalorder %s21, 0
      %p41 = por %p39, %p40
      %p42 = scmp.ne.s32.totalorder %s31, %s34
      %p43 = scmp.eq.s32.totalorder %s26, 1
      %p44 = por %p42, %p43
      %p45 = scmp.ne.s32.totalorder %s34, %s35
      %p46 = scmp.eq.s32.totalorder %s26, 0
      %p47 = por %p45, %p46
      %p48 = scmp.ne.s32.totalorder %s34, %s35
      %p49 = scmp.eq.s32.totalorder %s27, 1
      %p50 = por %p48, %p49
      %p52 = scmp.ne.s32.totalorder %s35, %s51
      %p53 = scmp.eq.s32.totalorder %s27, 0
      %p54 = por %p52, %p53
      %s56 = sadd.s32 %s55, 1
      %p59 = scmp.eq.s32.totalorder %s21, 1
      %p60 = scmp.ne.s32.totalorder %s55, %s57
      %p61 = scmp.eq.s32.totalorder %s21, 0
      %p62 = por %p60, %p61
      %p63 = scmp.ne.s32.totalorder %s55, %s57
      %p64 = scmp.eq.s32.totalorder %s26, 1
      %p65 = por %p63, %p64
      %p66 = scmp.ne.s32.totalorder %s57, %s58
      %p67 = scmp.eq.s32.totalorder %s26, 0
      %p68 = por %p66, %p67
      %p69 = scmp.ne.s32.totalorder %s57, %s58
      %p70 = scmp.eq.s32.totalorder %s27, 1
      %p71 = por %p69, %p70
      %p73 = scmp.ne.s32.totalorder %s58, %s72
      %p74 = scmp.eq.s32.totalorder %s27, 0
      %p75 = por %p73, %p74
      %s77 = sadd.s32 %s76, 1
      %p80 = scmp.eq.s32.totalorder %s21, 1
      %p81 = scmp.ne.s32.totalorder %s76, %s78
      %p82 = scmp.eq.s32.totalorder %s21, 0
      %p83 = por %p81, %p82
      %p84 = scmp.ne.s32.totalorder %s76, %s78
      %p85 = scmp.eq.s32.totalorder %s26, 1
      %p86 = por %p84, %p85
      %p87 = scmp.ne.s32.totalorder %s78, %s79
      %p88 = scmp.eq.s32.totalorder %s26, 0
      %p89 = por %p87, %p88
      %p90 = scmp.ne.s32.totalorder %s78, %s79
      %p91 = scmp.eq.s32.totalorder %s27, 1
      %p92 = por %p90, %p91
      %p94 = scmp.ne.s32.totalorder %s79, %s93
      %p95 = scmp.eq.s32.totalorder %s27, 0
      %p96 = por %p94, %p95
      %s98 = sadd.s32 %s97, 1
      %p101 = scmp.eq.s32.totalorder %s21, 1
      %p102 = scmp.ne.s32.totalorder %s97, %s99
      %p103 = scmp.eq.s32.totalorder %s21, 0
      %p104 = por %p102, %p103
      %p105 = scmp.ne.s32.totalorder %s97, %s99
      %p106 = scmp.eq.s32.totalorder %s26, 1
      %p107 = por %p105, %p106
      %p108 = scmp.ne.s32.totalorder %s99, %s100
      %p109 = scmp.eq.s32.totalorder %s26, 0
      %p110 = por %p108, %p109
      %p111 = scmp.ne.s32.totalorder %s99, %s100
      %p112 = scmp.eq.s32.totalorder %s27, 1
      %p113 = por %p111, %p112
      %p115 = scmp.ne.s32.totalorder %s100, %s114
      %p116 = scmp.eq.s32.totalorder %s27, 0
      %p117 = por %p115, %p116
      %s119 = sadd.s32 %s118, 1
      %p122 = scmp.eq.s32.totalorder %s21, 1
      %p123 = scmp.ne.s32.totalorder %s118, %s120
      %p124 = scmp.eq.s32.totalorder %s21, 0
      %p125 = por %p123, %p124
      %p126 = scmp.ne.s32.totalorder %s118, %s120
      %p127 = scmp.eq.s32.totalorder %s26, 1
      %p128 = por %p126, %p127
      %p129 = scmp.ne.s32.totalorder %s120, %s121
      %p130 = scmp.eq.s32.totalorder %s26, 0
      %p131 = por %p129, %p130
      %p132 = scmp.ne.s32.totalorder %s120, %s121
      %p133 = scmp.eq.s32.totalorder %s27, 1
      %p134 = por %p132, %p133
      %p136 = scmp.ne.s32.totalorder %s121, %s135
      %p137 = scmp.eq.s32.totalorder %s27, 0
      %p138 = por %p136, %p137
      %s140 = sadd.s32 %s139, 1
      %p143 = scmp.eq.s32.totalorder %s21, 1
      %p144 = scmp.ne.s32.totalorder %s139, %s141
      %p145 = scmp.eq.s32.totalorder %s21, 0
      %p146 = por %p144, %p145
      %p147 = scmp.ne.s32.totalorder %s139, %s141
      %p148 = scmp.eq.s32.totalorder %s26, 1
      %p149 = por %p147, %p148
      %p150 = scmp.ne.s32.totalorder %s141, %s142
      %p151 = scmp.eq.s32.totalorder %s26, 0
      %p152 = por %p150, %p151
      %p153 = scmp.ne.s32.totalorder %s141, %s142
      %p154 = scmp.eq.s32.totalorder %s27, 1
      %p155 = por %p153, %p154
      %p157 = scmp.ne.s32.totalorder %s142, %s156
      %p158 = scmp.eq.s32.totalorder %s27, 0
      %p159 = por %p157, %p158
      %s161 = sadd.s32 %s160, 1
      %p164 = scmp.eq.s32.totalorder %s21, 1
      %p165 = scmp.ne.s32.totalorder %s160, %s162
      %p166 = scmp.eq.s32.totalorder %s21, 0
      %p167 = por %p165, %p166
      %p168 = scmp.ne.s32.totalorder %s160, %s162
      %p169 = scmp.eq.s32.totalorder %s26, 1
      %p170 = por %p168, %p169
      %p171 = scmp.ne.s32.totalorder %s162, %s163
      %p172 = scmp.eq.s32.totalorder %s26, 0
      %p173 = por %p171, %p172
      %p174 = scmp.ne.s32.totalorder %s162, %s163
      %p175 = scmp.eq.s32.totalorder %s27, 1
      %p176 = por %p174, %p175
      %p178 = scmp.ne.s32.totalorder %s163, %s177
      %p179 = scmp.eq.s32.totalorder %s27, 0
      %p180 = por %p178, %p179
      %s181 = ssub.s32 %s21, %s28
      %p182 = scmp.eq.s32.totalorder %s181, 0
      %s184 = sadd.s32 %s183, 1
      %s185 = scalar_select %p182, %s183, %s184
      %p188 = pneg %p182
      %p189 = scmp.eq.s32.totalorder %s21, 1
      %p190 = por %p188, %p189
      %p191 = scmp.ne.s32.totalorder %s183, %s186
      %p192 = scmp.eq.s32.totalorder %s21, 0
      %p193 = por %p191, %p192
      %p194 = scmp.ne.s32.totalorder %s183, %s186
      %p195 = scmp.eq.s32.totalorder %s26, 1
      %p196 = por %p194, %p195
      %p197 = scmp.ne.s32.totalorder %s186, %s187
      %p198 = scmp.eq.s32.totalorder %s26, 0
      %p199 = por %p197, %p198
      %p200 = scmp.ne.s32.totalorder %s186, %s187
      %p201 = scmp.eq.s32.totalorder %s27, 1
      %p202 = por %p200, %p201
      %p204 = scmp.ne.s32.totalorder %s187, %s203
      %p205 = scmp.eq.s32.totalorder %s27, 0
      %p206 = por %p204, %p205
      %p207 = scmp.le.s32.totalorder 1, %s21
      %p208 = scmp.lt.s32.totalorder %s21, 3
      %p209 = pnand %p207, %p208
      %p210 = pneg %p209
      // Predicated region
      $region9: #{tpu_custom_call.1} parent=5 // pred_check
        _
      $region10: #{tpu_custom_call.1} parent=5 // pred_check_branch
        %212 = sbr.rel (%p209) target = $region12
      $region11: #{tpu_custom_call.1} parent=5 // pred_region
        %s213 = ssub.s32 %s21, 1
        // Predicated region
        $region13: #{tpu_custom_call.1} parent=11 // pred_check
          %p214 = pneg %p68
        $region14: #{tpu_custom_call.1} parent=11 // pred_check_branch
          %216 = sbr.rel (%p214) target = $region16
        $region15: #{tpu_custom_call.1} parent=11 // pred_region
          %s218 = ssub.s32 1024, 1024
          %219 = vsyncadd [#allocation6], %s218
          %s220 = sshll.u32 [#allocation5], 4
          %s221 = int_to_ptr.vmem [resolvable:$true] %s220
          %226 = dma.hbm_to_vmem [thread:$0]  %s1, 1024, %s221, [#allocation6], 128, 128, 8
        $region16: #{tpu_custom_call.1} parent=11 // pred_fallthru
          _
        // Predicated region
        $region17: #{tpu_custom_call.1} parent=11 // pred_check
          %p227 = pneg %p89
        $region18: #{tpu_custom_call.1} parent=11 // pred_check_branch
          %229 = sbr.rel (%p227) target = $region20
        $region19: #{tpu_custom_call.1} parent=11 // pred_region
          _
        $region20: #{tpu_custom_call.1} parent=11 // pred_fallthru
          _
        // Predicated region
        $region21: #{tpu_custom_call.1} parent=11 // pred_check
          %p230 = pneg %p110
        $region22: #{tpu_custom_call.1} parent=11 // pred_check_branch
          %232 = sbr.rel (%p230) target = $region24
        $region23: #{tpu_custom_call.1} parent=11 // pred_region
          %s234 = ssub.s32 2048, 2048
          %235 = vsyncadd [#allocation6], %s234
          %s236 = sshll.u32 [#allocation7], 4
          %s237 = int_to_ptr.vmem [resolvable:$true] %s236
          %242 = dma.hbm_to_vmem [thread:$0]  %s3, 2048, %s237, [#allocation6], 128, 128, 8
        $region24: #{tpu_custom_call.1} parent=11 // pred_fallthru
          _
        // Predicated region
        $region25: #{tpu_custom_call.1} parent=11 // pred_check
          %p243 = pneg %p131
        $region26: #{tpu_custom_call.1} parent=11 // pred_check_branch
          %245 = sbr.rel (%p243) target = $region28
        $region27: #{tpu_custom_call.1} parent=11 // pred_region
          _
        $region28: #{tpu_custom_call.1} parent=11 // pred_fallthru
          _
        // Predicated region
        $region29: #{tpu_custom_call.1} parent=11 // pred_check
          %p246 = pneg %p152
        $region30: #{tpu_custom_call.1} parent=11 // pred_check_branch
          %248 = sbr.rel (%p246) target = $region32
        $region31: #{tpu_custom_call.1} parent=11 // pred_region
          %s250 = ssub.s32 2048, 2048
          %251 = vsyncadd [#allocation9], %s250
          %s252 = sshll.u32 [#allocation8], 4
          %s253 = int_to_ptr.vmem [resolvable:$true] %s252
          %258 = dma.hbm_to_vmem [thread:$0]  %s5, 2048, %s253, [#allocation9], 128, 128, 8
        $region32: #{tpu_custom_call.1} parent=11 // pred_fallthru
          _
        // Predicated region
        $region33: #{tpu_custom_call.1} parent=11 // pred_check
          %p259 = pneg %p173
        $region34: #{tpu_custom_call.1} parent=11 // pred_check_branch
          %261 = sbr.rel (%p259) target = $region36
        $region35: #{tpu_custom_call.1} parent=11 // pred_region
          _
        $region36: #{tpu_custom_call.1} parent=11 // pred_fallthru
          _
      $region12: #{tpu_custom_call.1} parent=5 // pred_fallthru
        _
      %p262 = scmp.lt.s32.totalorder %s21, 2
      // Predicated region
      $region37: #{tpu_custom_call.1} parent=5 // pred_check
        %p263 = pneg %p262
      $region38: #{tpu_custom_call.1} parent=5 // pred_check_branch
        %265 = sbr.rel (%p263) target = $region40
      $region39: #{tpu_custom_call.1} parent=5 // pred_region
        // Predicated region
        $region41: #{tpu_custom_call.1} parent=39 // pred_check
          %p266 = pneg %p41
        $region42: #{tpu_custom_call.1} parent=39 // pred_check_branch
          %268 = sbr.rel (%p266) target = $region44
        $region43: #{tpu_custom_call.1} parent=39 // pred_region
          %s269 = sand.u32 %s31, 1
          %s270 = scalar_lea.sflag [#allocation3], %s269
          %s271 = sand.u32 %s31, 1
          %s272 = smul.addr %s271, 8
          %s273 = scalar_lea.vmem [#allocation2], %s272
          %s275 = ssub.s32 128, 128
          %276 = vsyncadd %s270, %s275
          %s277 = smul.addr %s21, 128
          %s278 = scalar_lea.hbm %s0, %s277
          %s280 = sshll.u32 %s273, 4
          %s281 = int_to_ptr.vmem [resolvable:$true] %s280
          %283 = dma.hbm_to_vmem [thread:$0]  %s278, 128, %s281, %s270
        $region44: #{tpu_custom_call.1} parent=39 // pred_fallthru
          _
      $region40: #{tpu_custom_call.1} parent=5 // pred_fallthru
        _
      %p284 = scmp.le.s32.totalorder 1, %s21
      %p285 = scmp.lt.s32.totalorder %s21, 3
      %p286 = pnand %p284, %p285
      %p287 = pneg %p286
      // Predicated region
      $region45: #{tpu_custom_call.1} parent=5 // pred_check
        _
      $region46: #{tpu_custom_call.1} parent=5 // pred_check_branch
        %289 = sbr.rel (%p286) target = $region48
      $region47: #{tpu_custom_call.1} parent=5 // pred_region
        %s290 = ssub.s32 %s21, 1
        %s291 = sand.u32 %s34, 1
        %s292 = scalar_lea.sflag [#allocation3], %s291
        %s293 = sand.u32 %s34, 1
        %s294 = smul.addr %s293, 8
        %s295 = scalar_lea.vmem [#allocation2], %s294
        // Predicated region
        $region49: #{tpu_custom_call.1} parent=47 // pred_check
          %p296 = pneg %p47
        $region50: #{tpu_custom_call.1} parent=47 // pred_check_branch
          %298 = sbr.rel (%p296) target = $region52
        $region51: #{tpu_custom_call.1} parent=47 // pred_region
          %299 = dma.done %s292, 128
        $region52: #{tpu_custom_call.1} parent=47 // pred_fallthru
          _
        // Predicated region
        $region53: #{tpu_custom_call.1} parent=47 // pred_check
          %p300 = pneg %p68
        $region54: #{tpu_custom_call.1} parent=47 // pred_check_branch
          %302 = sbr.rel (%p300) target = $region56
        $region55: #{tpu_custom_call.1} parent=47 // pred_region
          %303 = dma.done [#allocation6], 1024
        $region56: #{tpu_custom_call.1} parent=47 // pred_fallthru
          _
        // Predicated region
        $region57: #{tpu_custom_call.1} parent=47 // pred_check
          %p304 = pneg %p110
        $region58: #{tpu_custom_call.1} parent=47 // pred_check_branch
          %306 = sbr.rel (%p304) target = $region60
        $region59: #{tpu_custom_call.1} parent=47 // pred_region
          %307 = dma.done [#allocation6], 2048
        $region60: #{tpu_custom_call.1} parent=47 // pred_fallthru
          _
        // Predicated region
        $region61: #{tpu_custom_call.1} parent=47 // pred_check
          %p308 = pneg %p152
        $region62: #{tpu_custom_call.1} parent=47 // pred_check_branch
          %310 = sbr.rel (%p308) target = $region64
        $region63: #{tpu_custom_call.1} parent=47 // pred_region
          %311 = dma.done [#allocation9], 2048
        $region64: #{tpu_custom_call.1} parent=47 // pred_fallthru
          _
        %s312 = sand.u32 %s34, 1
        %s313 = scalar_lea.sflag [#allocation3], %s312
        %s314 = sand.u32 %s34, 1
        %s315 = smul.addr %s314, 8
        %s316 = scalar_lea.vmem [#allocation2], %s315
        %p317 = pneg %p47
        %p318 = pneg %p44
        %p319 = pneg %p68
        %p320 = pneg %p65
        %p321 = pneg %p89
        %p322 = pneg %p86
        %p323 = pneg %p110
        %p324 = pneg %p107
        %p325 = pneg %p131
        %p326 = pneg %p128
        %p327 = pneg %p152
        %p328 = pneg %p149
        %p329 = pneg %p173
        %p330 = pneg %p170
        %p331 = pneg %p199
        %p332 = pneg %p196
        %s333 = sand.u32 %s186, 1
        %s334 = scalar_lea.sflag [#allocation4], %s333
        %s335 = sand.u32 %s186, 1
        %s336 = smul.addr %s335, 8
        %s337 = scalar_lea.vmem [#allocation10], %s336
        %v338 = vld [vmem:[%s295] sm:$0xff]
        %v339 = vld [vmem:[#allocation5] sm:$0xff]
        %v340 = vld [vmem:[#allocation5 + $0x8] sm:$0xff]
        %v341 = vld [vmem:[#allocation5 + $0x10] sm:$0xff]
        %v342 = vld [vmem:[#allocation5 + $0x18] sm:$0xff]
        %v343 = vld [vmem:[#allocation5 + $0x20] sm:$0xff]
        %v344 = vld [vmem:[#allocation5 + $0x28] sm:$0xff]
        %v345 = vld [vmem:[#allocation5 + $0x30] sm:$0xff]
        %v346 = vld [vmem:[#allocation5 + $0x38] sm:$0xff]
        %v347 = vld [vmem:[%s2] sm:$0x1]
        %v349 = vlaneseq
        %v350 = vshrl.u32 %v349, 7
        %v351 = vsub.s32 0, %v350
        %v352 = vrot.slane %v347, %v351
        %vm354 = vcmask 523264
        %v356 = vsel %vm354, %v338, 0
        %358 = vmatprep.subr.mxu0 0.0
        %359 = vmatpush1.msra.mxu0 %v339
        %360 = vmatprep.subr.mxu0 0.0
        %361 = vmatpush1.msra.mxu0 %v340
        %362 = vmatprep.subr.mxu0 0.0
        %363 = vmatpush1.msra.mxu0 %v341
        %364 = vmatprep.subr.mxu0 0.0
        %365 = vmatpush1.msra.mxu0 %v342
        %366 = vmatprep.subr.mxu0 0.0
        %367 = vmatpush1.msra.mxu0 %v343
        %368 = vmatprep.subr.mxu0 0.0
        %369 = vmatpush1.msra.mxu0 %v344
        %370 = vmatprep.subr.mxu0 0.0
        %371 = vmatpush1.msra.mxu0 %v345
        %372 = vmatprep.subr.mxu0 0.0
        %373 = vmatpush1.msra.mxu0 %v346
        %374 = vmatprep.subr.mxu0 0.0
        %375 = vmatpush1.msra.mxu0 0.0
        %376 = vmatprep.subr.mxu0 0.0
        %377 = vmatpush1.msra.mxu0 0.0
        %378 = vmatprep.subr.mxu0 0.0
        %379 = vmatpush1.msra.mxu0 0.0
        %380 = vmatprep.subr.mxu0 0.0
        %381 = vmatpush1.msra.mxu0 0.0
        %382 = vmatprep.subr.mxu0 0.0
        %383 = vmatpush1.msra.mxu0 0.0
        %384 = vmatprep.subr.mxu0 0.0
        %385 = vmatpush1.msra.mxu0 0.0
        %386 = vmatprep.subr.mxu0 0.0
        %387 = vmatpush1.msra.mxu0 0.0
        %388 = vmatprep.subr.mxu0 0.0
        %389 = vmatpush1.msra.mxu0 0.0
        %390 = vmatprep.subr.mxu0 0.0
        %391 = vmatpush1.msra.mxu0 0.0
        %392 = vmatprep.subr.mxu0 0.0
        %393 = vmatpush1.msra.mxu0 0.0
        %394 = vmatprep.subr.mxu0 0.0
        %395 = vmatpush1.msra.mxu0 0.0
        %396 = vmatprep.subr.mxu0 0.0
        %397 = vmatpush1.msra.mxu0 0.0
        %398 = vmatprep.subr.mxu0 0.0
        %399 = vmatpush1.msra.mxu0 0.0
        %400 = vmatprep.subr.mxu0 0.0
        %401 = vmatpush1.msra.mxu0 0.0
        %402 = vmatprep.subr.mxu0 0.0
        %403 = vmatpush1.msra.mxu0 0.0
        %404 = vmatprep.subr.mxu0 0.0
        %405 = vmatpush1.msra.mxu0 0.0
        %406 = vmatprep.subr.mxu0 0.0
        %407 = vmatpush1.msra.mxu0 0.0
        %408 = vmatprep.subr.mxu0 0.0
        %409 = vmatpush1.msra.mxu0 0.0
        %410 = vmatprep.subr.mxu0 0.0
        %411 = vmatpush1.msra.mxu0 0.0
        %412 = vmatprep.subr.mxu0 0.0
        %413 = vmatpush1.msra.mxu0 0.0
        %414 = vmatprep.subr.mxu0 0.0
        %415 = vmatpush1.msra.mxu0 0.0
        %416 = vmatprep.subr.mxu0 0.0
        %417 = vmatpush1.msra.mxu0 0.0
        %418 = vmatprep.subr.mxu0 0.0
        %419 = vmatpush1.msra.mxu0 0.0
        %420 = vmatprep.subr.mxu0 0.0
        %421 = vmatpush1.msra.mxu0 0.0
        %422 = vmatprep.mubr.f32.mxu0 0.0
        %423 = vmatmul.mubr.f32.gmra.mrb[0].mxu0 %v356
        %v424 = vpop.f32.mrb[0].mxu0
        %v425 = vadd.f32 %v352, %v424
        %v426 = vpop.f32.mrb[0].mxu0
        %427 = vdwg.mxu0
        %v428 = vmax.f32 %v425, 0.0
        %v429 = vld [vmem:[#allocation7] sm:$0xff]
        %v430 = vld [vmem:[#allocation7 + $0x8] sm:$0xff]
        %v431 = vld [vmem:[#allocation7 + $0x10] sm:$0xff]
        %v432 = vld [vmem:[#allocation7 + $0x18] sm:$0xff]
        %v433 = vld [vmem:[#allocation7 + $0x20] sm:$0xff]
        %v434 = vld [vmem:[#allocation7 + $0x28] sm:$0xff]
        %v435 = vld [vmem:[#allocation7 + $0x30] sm:$0xff]
        %v436 = vld [vmem:[#allocation7 + $0x38] sm:$0xff]
        %v437 = vld [vmem:[#allocation7 + $0x40] sm:$0xff]
        %v438 = vld [vmem:[#allocation7 + $0x48] sm:$0xff]
        %v439 = vld [vmem:[#allocation7 + $0x50] sm:$0xff]
        %v440 = vld [vmem:[#allocation7 + $0x58] sm:$0xff]
        %v441 = vld [vmem:[#allocation7 + $0x60] sm:$0xff]
        %v442 = vld [vmem:[#allocation7 + $0x68] sm:$0xff]
        %v443 = vld [vmem:[#allocation7 + $0x70] sm:$0xff]
        %v444 = vld [vmem:[#allocation7 + $0x78] sm:$0xff]
        %v445 = vld [vmem:[%s4] sm:$0x1]
        %v447 = vlaneseq
        %v448 = vshrl.u32 %v447, 7
        %v449 = vsub.s32 0, %v448
        %v450 = vrot.slane %v445, %v449
        %452 = vmatprep.subr.mxu0 0.0
        %453 = vmatpush1.msra.mxu0 %v429
        %454 = vmatprep.subr.mxu0 0.0
        %455 = vmatpush1.msra.mxu0 %v430
        %456 = vmatprep.subr.mxu0 0.0
        %457 = vmatpush1.msra.mxu0 %v431
        %458 = vmatprep.subr.mxu0 0.0
        %459 = vmatpush1.msra.mxu0 %v432
        %460 = vmatprep.subr.mxu0 0.0
        %461 = vmatpush1.msra.mxu0 %v433
        %462 = vmatprep.subr.mxu0 0.0
        %463 = vmatpush1.msra.mxu0 %v434
        %464 = vmatprep.subr.mxu0 0.0
        %465 = vmatpush1.msra.mxu0 %v435
        %466 = vmatprep.subr.mxu0 0.0
        %467 = vmatpush1.msra.mxu0 %v436
        %468 = vmatprep.subr.mxu0 0.0
        %469 = vmatpush1.msra.mxu0 %v437
        %470 = vmatprep.subr.mxu0 0.0
        %471 = vmatpush1.msra.mxu0 %v438
        %472 = vmatprep.subr.mxu0 0.0
        %473 = vmatpush1.msra.mxu0 %v439
        %474 = vmatprep.subr.mxu0 0.0
        %475 = vmatpush1.msra.mxu0 %v440
        %476 = vmatprep.subr.mxu0 0.0
        %477 = vmatpush1.msra.mxu0 %v441
        %478 = vmatprep.subr.mxu0 0.0
        %479 = vmatpush1.msra.mxu0 %v442
        %480 = vmatprep.subr.mxu0 0.0
        %481 = vmatpush1.msra.mxu0 %v443
        %482 = vmatprep.subr.mxu0 0.0
        %483 = vmatpush1.msra.mxu0 %v444
        %484 = vmatprep.subr.mxu0 0.0
        %485 = vmatpush1.msra.mxu0 0.0
        %486 = vmatprep.subr.mxu0 0.0
        %487 = vmatpush1.msra.mxu0 0.0
        %488 = vmatprep.subr.mxu0 0.0
        %489 = vmatpush1.msra.mxu0 0.0
        %490 = vmatprep.subr.mxu0 0.0
        %491 = vmatpush1.msra.mxu0 0.0
        %492 = vmatprep.subr.mxu0 0.0
        %493 = vmatpush1.msra.mxu0 0.0
        %494 = vmatprep.subr.mxu0 0.0
        %495 = vmatpush1.msra.mxu0 0.0
        %496 = vmatprep.subr.mxu0 0.0
        %497 = vmatpush1.msra.mxu0 0.0
        %498 = vmatprep.subr.mxu0 0.0
        %499 = vmatpush1.msra.mxu0 0.0
        %500 = vmatprep.subr.mxu0 0.0
        %501 = vmatpush1.msra.mxu0 0.0
        %502 = vmatprep.subr.mxu0 0.0
        %503 = vmatpush1.msra.mxu0 0.0
        %504 = vmatprep.subr.mxu0 0.0
        %505 = vmatpush1.msra.mxu0 0.0
        %506 = vmatprep.subr.mxu0 0.0
        %507 = vmatpush1.msra.mxu0 0.0
        %508 = vmatprep.subr.mxu0 0.0
        %509 = vmatpush1.msra.mxu0 0.0
        %510 = vmatprep.subr.mxu0 0.0
        %511 = vmatpush1.msra.mxu0 0.0
        %512 = vmatprep.subr.mxu0 0.0
        %513 = vmatpush1.msra.mxu0 0.0
        %514 = vmatprep.subr.mxu0 0.0
        %515 = vmatpush1.msra.mxu0 0.0
        %516 = vmatprep.mubr.f32.mxu0 0.0
        %517 = vmatmul.mubr.f32.gmra.mrb[0].mxu0 %v428
        %v518 = vpop.f32.mrb[0].mxu0
        %v519 = vadd.f32 %v450, %v518
        %v520 = vpop.f32.mrb[0].mxu0
        %521 = vdwg.mxu0
        %v522 = vmax.f32 %v519, 0.0
        %v523 = vld [vmem:[#allocation8] sm:$0xff]
        %v524 = vld [vmem:[#allocation8 + $0x8] sm:$0xff]
        %v525 = vld [vmem:[#allocation8 + $0x10] sm:$0xff]
        %v526 = vld [vmem:[#allocation8 + $0x18] sm:$0xff]
        %v527 = vld [vmem:[#allocation8 + $0x20] sm:$0xff]
        %v528 = vld [vmem:[#allocation8 + $0x28] sm:$0xff]
        %v529 = vld [vmem:[#allocation8 + $0x30] sm:$0xff]
        %v530 = vld [vmem:[#allocation8 + $0x38] sm:$0xff]
        %v531 = vld [vmem:[#allocation8 + $0x40] sm:$0xff]
        %v532 = vld [vmem:[#allocation8 + $0x48] sm:$0xff]
        %v533 = vld [vmem:[#allocation8 + $0x50] sm:$0xff]
        %v534 = vld [vmem:[#allocation8 + $0x58] sm:$0xff]
        %v535 = vld [vmem:[#allocation8 + $0x60] sm:$0xff]
        %v536 = vld [vmem:[#allocation8 + $0x68] sm:$0xff]
        %v537 = vld [vmem:[#allocation8 + $0x70] sm:$0xff]
        %v538 = vld [vmem:[#allocation8 + $0x78] sm:$0xff]
        %v539 = vld [vmem:[%s6] sm:$0x1]
        %v541 = vlaneseq
        %v542 = vshrl.u32 %v541, 7
        %v543 = vsub.s32 0, %v542
        %v544 = vrot.slane %v539, %v543
        %546 = vmatprep.subr.mxu0 0.0
        %547 = vmatpush1.msra.mxu0 %v523
        %548 = vmatprep.subr.mxu0 0.0
        %549 = vmatpush1.msra.mxu0 %v524
        %550 = vmatprep.subr.mxu0 0.0
        %551 = vmatpush1.msra.mxu0 %v525
        %552 = vmatprep.subr.mxu0 0.0
        %553 = vmatpush1.msra.mxu0 %v526
        %554 = vmatprep.subr.mxu0 0.0
        %555 = vmatpush1.msra.mxu0 %v527
        %556 = vmatprep.subr.mxu0 0.0
        %557 = vmatpush1.msra.mxu0 %v528
        %558 = vmatprep.subr.mxu0 0.0
        %559 = vmatpush1.msra.mxu0 %v529
        %560 = vmatprep.subr.mxu0 0.0
        %561 = vmatpush1.msra.mxu0 %v530
        %562 = vmatprep.subr.mxu0 0.0
        %563 = vmatpush1.msra.mxu0 %v531
        %564 = vmatprep.subr.mxu0 0.0
        %565 = vmatpush1.msra.mxu0 %v532
        %566 = vmatprep.subr.mxu0 0.0
        %567 = vmatpush1.msra.mxu0 %v533
        %568 = vmatprep.subr.mxu0 0.0
        %569 = vmatpush1.msra.mxu0 %v534
        %570 = vmatprep.subr.mxu0 0.0
        %571 = vmatpush1.msra.mxu0 %v535
        %572 = vmatprep.subr.mxu0 0.0
        %573 = vmatpush1.msra.mxu0 %v536
        %574 = vmatprep.subr.mxu0 0.0
        %575 = vmatpush1.msra.mxu0 %v537
        %576 = vmatprep.subr.mxu0 0.0
        %577 = vmatpush1.msra.mxu0 %v538
        %578 = vmatprep.subr.mxu0 0.0
        %579 = vmatpush1.msra.mxu0 0.0
        %580 = vmatprep.subr.mxu0 0.0
        %581 = vmatpush1.msra.mxu0 0.0
        %582 = vmatprep.subr.mxu0 0.0
        %583 = vmatpush1.msra.mxu0 0.0
        %584 = vmatprep.subr.mxu0 0.0
        %585 = vmatpush1.msra.mxu0 0.0
        %586 = vmatprep.subr.mxu0 0.0
        %587 = vmatpush1.msra.mxu0 0.0
        %588 = vmatprep.subr.mxu0 0.0
        %589 = vmatpush1.msra.mxu0 0.0
        %590 = vmatprep.subr.mxu0 0.0
        %591 = vmatpush1.msra.mxu0 0.0
        %592 = vmatprep.subr.mxu0 0.0
        %593 = vmatpush1.msra.mxu0 0.0
        %594 = vmatprep.subr.mxu0 0.0
        %595 = vmatpush1.msra.mxu0 0.0
        %596 = vmatprep.subr.mxu0 0.0
        %597 = vmatpush1.msra.mxu0 0.0
        %598 = vmatprep.subr.mxu0 0.0
        %599 = vmatpush1.msra.mxu0 0.0
        %600 = vmatprep.subr.mxu0 0.0
        %601 = vmatpush1.msra.mxu0 0.0
        %602 = vmatprep.subr.mxu0 0.0
        %603 = vmatpush1.msra.mxu0 0.0
        %604 = vmatprep.subr.mxu0 0.0
        %605 = vmatpush1.msra.mxu0 0.0
        %606 = vmatprep.subr.mxu0 0.0
        %607 = vmatpush1.msra.mxu0 0.0
        %608 = vmatprep.subr.mxu0 0.0
        %609 = vmatpush1.msra.mxu0 0.0
        %610 = vmatprep.mubr.f32.mxu0 0.0
        %611 = vmatmul.mubr.f32.gmra.mrb[0].mxu0 %v522
        %v612 = vpop.f32.mrb[0].mxu0
        %v613 = vadd.f32 %v544, %v612
        %v614 = vpop.f32.mrb[0].mxu0
        %615 = vdwg.mxu0
        %616 = vst [vmem:[%s337] sm:$0xff] %v613
        %s617 = sand.u32 %s186, 1
        %s618 = scalar_lea.sflag [#allocation4], %s617
        %s619 = sand.u32 %s186, 1
        %s620 = smul.addr %s619, 8
        %s621 = scalar_lea.vmem [#allocation10], %s620
        // Predicated region
        $region65: #{tpu_custom_call.1} parent=47 // pred_check
          %p622 = pneg %p196
        $region66: #{tpu_custom_call.1} parent=47 // pred_check_branch
          %624 = sbr.rel (%p622) target = $region68
        $region67: #{tpu_custom_call.1} parent=47 // pred_region
          %s626 = ssub.s32 128, 128
          %627 = vsyncadd %s618, %s626
          %s628 = smul.addr %s26, 128
          %s629 = scalar_lea.hbm %s7, %s628
          %s631 = sshll.u32 %s621, 4
          %s632 = int_to_ptr.vmem [resolvable:$true] %s631
          %634 = dma.vmem_to_hbm [thread:$0]  %s632, 128, %s629, %s618
        $region68: #{tpu_custom_call.1} parent=47 // pred_fallthru
          _
      $region48: #{tpu_custom_call.1} parent=5 // pred_fallthru
        _
      %p635 = scmp.le.s32.totalorder 2, %s21
      // Predicated region
      $region69: #{tpu_custom_call.1} parent=5 // pred_check
        %p636 = pneg %p635
      $region70: #{tpu_custom_call.1} parent=5 // pred_check_branch
        %638 = sbr.rel (%p636) target = $region72
      $region71: #{tpu_custom_call.1} parent=5 // pred_region
        %s639 = ssub.s32 %s21, 2
        // Predicated region
        $region73: #{tpu_custom_call.1} parent=71 // pred_check
          %p640 = pneg %p202
        $region74: #{tpu_custom_call.1} parent=71 // pred_check_branch
          %642 = sbr.rel (%p640) target = $region76
        $region75: #{tpu_custom_call.1} parent=71 // pred_region
          %s643 = sand.u32 %s187, 1
          %s644 = scalar_lea.sflag [#allocation4], %s643
          %s645 = sand.u32 %s187, 1
          %s646 = smul.addr %s645, 8
          %s647 = scalar_lea.vmem [#allocation10], %s646
          %648 = dma.done %s644, 128
        $region76: #{tpu_custom_call.1} parent=71 // pred_fallthru
          _
      $region72: #{tpu_custom_call.1} parent=5 // pred_fallthru
        _
    $region6: #{tpu_custom_call.1} parent=1 // loop_footer
      %s25 = sadd.s32 1, %s21
    $region7: #{tpu_custom_call.1} parent=1 // loop_footer_branch
      %20 = sbr.rel target = $region3
    $region8: #{tpu_custom_call.1} parent=1 // loop_exit
      _
    %649 = vsyncpa [#allocation3], 1
    %s650 = scalar_lea.sflag [#allocation3], 1
    %651 = vsyncpa %s650, 1
    %652 = vsyncpa [#allocation6], 1
    %653 = vsyncpa [#allocation9], 1
    %654 = vsyncpa [#allocation4], 1
    %s655 = scalar_lea.sflag [#allocation4], 1
    %656 = vsyncpa %s655, 1

</llo_original>
